<compile_context>
chip_gen: v7x
topology: tpu7x:2x2x1
jax: 0.10.0
libtpu: 0.0.40
codegen_flags: <defaults>
</compile_context>

<pallas_src>
import math

import jax
import jax.numpy as jnp
import numpy as np
from jax.experimental import pallas as pl
from jax.experimental.pallas import tpu as pltpu


# ----------------------------- Pallas kernel --------------------------------
def _make_global_pointer_kernel(heads, head_size, seq_len, q_tile, tril_neg):
    hd = head_size
    S = seq_len
    TQ = q_tile

    def kernel(x_ref, wq_ref, wk_ref, bq_ref, bk_ref, mrow_ref, mcol_ref,
               o_ref, projk_s):
        """Grid point = (batch b, query tile qt).

        x_ref     : [1, S, H]        f32 tokens for batch b (resident across qt)
        wq_ref    : [heads, H, hd]   f32, RoPE + 1/sqrt(hd) folded Q weights
        wk_ref    : [heads, H, hd]   f32, RoPE-folded K weights
        bq_ref    : [heads, 1, hd]   f32 folded Q bias
        bk_ref    : [heads, 1, hd]   f32 folded K bias
        mrow_ref  : [1, TQ, 1]       f32 additive row (query) pad term (0 / -inf)
        mcol_ref  : [1, 1, S]        f32 additive col (key) pad term (0 / -inf)
        o_ref     : [1, heads, TQ, S] f32 logits (final layout, no wrapper transpose)
        projk_s   : [heads, S, hd]   f32 VMEM scratch, K projection (whole sequence)
        """
        qt = pl.program_id(1)

        # K projection for the full sequence, once per batch (first q-tile only).
        @pl.when(qt == 0)
        def _():
            x_full = x_ref[0]                                            # [S, H]
            for h in range(heads):                                       # static unroll
                kh = jnp.dot(x_full, wk_ref[h],
                             preferred_element_type=jnp.float32) + bk_ref[h]
                projk_s[h] = kh                                          # [S, hd]

        q_start = pl.multiple_of(qt * TQ, TQ)
        x_tile = x_ref[0, pl.ds(q_start, TQ), :]                         # [TQ, H]

        # Additive mask for this (TQ, S) tile: padding -> -inf (row + col terms),
        # strict lower triangle -> -1e12 * scale (scale is folded into Q weights).
        pad_add = mrow_ref[0] + mcol_ref[0]                              # [TQ,1]+[1,S] -> [TQ,S]
        row_idx = jax.lax.broadcasted_iota(jnp.int32, (TQ, S), 0) + q_start
        col_idx = jax.lax.broadcasted_iota(jnp.int32, (TQ, S), 1)
        amask = pad_add + jnp.where(row_idx > col_idx,
                                    jnp.float32(tril_neg), jnp.float32(0.0))

        for h in range(heads):                                           # static unroll
            q_h = jnp.dot(x_tile, wq_ref[h],
                          preferred_element_type=jnp.float32) + bq_ref[h]   # [TQ, hd]
            k_h = projk_s[h]                                                 # [S, hd]
            # einsum('md,nd->mn'): contract last dims directly, no .T relayout.
            lg = jax.lax.dot_general(q_h, k_h, (((1,), (1,)), ((), ())),
                                     preferred_element_type=jnp.float32)    # [TQ, S]
            # Per-head lane-dense store straight into the final layout.
            o_ref[0, h] = lg + amask

    return kernel


# ----------------------------- wrapper (glue) --------------------------------
def make_rope_tables(max_len, head_size):
    """Replicates get_sinusoid_encoding_table + repeat_interleave(2)."""
    pos = jnp.arange(max_len, dtype=jnp.float32)[:, None]                      # [L, 1]
    div = jnp.exp(jnp.arange(0, head_size, 2, dtype=jnp.float32)
                  * (-math.log(10000.0) / head_size))                          # [hd/2]
    ang = pos * div                                                             # [L, hd/2]
    cos_pos = jnp.repeat(jnp.cos(ang), 2, axis=-1)                              # [L, hd]
    sin_pos = jnp.repeat(jnp.sin(ang), 2, axis=-1)                              # [L, hd]
    return cos_pos, sin_pos


def _pair_swap(t):
    """t[..., 2i] -> -t[..., 2i+1]; t[..., 2i+1] -> t[..., 2i] (last axis)."""
    return jnp.stack([-t[..., 1::2], t[..., 0::2]], axis=-1).reshape(t.shape)


def global_pointer_forward(x, W, bvec, mask, *, heads, head_size, max_len=64,
                           q_tile=None):
    """x: [B, S, H] f32; W: [H, heads*head_size*2]; bvec: [heads*head_size*2];
       mask: [B, S] f32 (1 = keep, 0 = pad). Returns logits [B, heads, S, S] f32."""
    B, S, H = x.shape
    hd = head_size
    assert max_len >= heads, "reference indexes cos/sin by the heads axis"
    scale = 1.0 / (hd ** 0.5)

    # --- fold RoPE into the dense weights (cos/sin constant over sequence; see note) ---
    cos_pos, sin_pos = make_rope_tables(max_len, hd)
    cos_h = cos_pos[:heads]                                     # [heads, hd]
    sin_h = sin_pos[:heads]                                     # [heads, hd]

    W_r = W.reshape(H, heads, 2 * hd)                           # head h = chunk h
    Wq, Wk = W_r[..., :hd], W_r[..., hd:]                       # [H, heads, hd]
    b_r = bvec.reshape(heads, 2 * hd)
    bq, bk = b_r[:, :hd], b_r[:, hd:]                           # [heads, hd]

    def rope_fold(t, c, s):
        return t * c + _pair_swap(t) * s

    Wq_eff = rope_fold(Wq, cos_h[None], sin_h[None]) * scale    # scale folded into Q side
    Wk_eff = rope_fold(Wk, cos_h[None], sin_h[None])
    bq_eff = rope_fold(bq, cos_h, sin_h) * scale
    bk_eff = rope_fold(bk, cos_h, sin_h)

    # Per-head-major layouts so the kernel indexes heads on the leading axis only.
    Wq_eff = jnp.transpose(Wq_eff, (1, 0, 2)).astype(jnp.float32)   # [heads, H, hd]
    Wk_eff = jnp.transpose(Wk_eff, (1, 0, 2)).astype(jnp.float32)   # [heads, H, hd]
    bq_eff = bq_eff.reshape(heads, 1, hd).astype(jnp.float32)
    bk_eff = bk_eff.reshape(heads, 1, hd).astype(jnp.float32)

    # --- tiny additive pad terms from the raw [B, S] mask (no [B,S,S] pass) ---
    neg_inf = jnp.float32(-jnp.inf)
    pad_add = jnp.where(mask > 0, jnp.float32(0.0), neg_inf).astype(jnp.float32)  # [B, S]
    mrow_add = pad_add.reshape(B, S, 1)
    mcol_add = pad_add.reshape(B, 1, S)

    # --- query-dimension tiling ---
    if q_tile is None:
        q_tile = S if S <= 256 else 256
    if S % q_tile != 0:
        q_tile = S
    nq = S // q_tile
    tril_neg = -1e12 * scale

    kernel = _make_global_pointer_kernel(heads, hd, S, q_tile, tril_neg)

    # VMEM budget (double-buffered blocks + scratch), with headroom; keep under
    # v7x's 64 MiB physical cap.
    blk_bytes = (S * H * 4                       # x block
                 + 2 * heads * H * hd * 4        # Wq + Wk
                 + 2 * heads * hd * 4            # bq + bk
                 + q_tile * 4 + S * 4            # mask terms
                 + heads * q_tile * S * 4)       # output block
    scratch_bytes = heads * S * hd * 4
    vmem_limit = int(min(max(2 * blk_bytes + scratch_bytes + (8 << 20), 32 << 20),
                         64 << 20))

    out = pl.pallas_call(
        kernel,
        out_shape=jax.ShapeDtypeStruct((B, heads, S, S), jnp.float32),
        grid=(B, nq),
        in_specs=[
            pl.BlockSpec((1, S, H), lambda b, qt: (b, 0, 0)),          # x (resident per batch)
            pl.BlockSpec((heads, H, hd), lambda b, qt: (0, 0, 0)),     # Wq_eff (constant)
            pl.BlockSpec((heads, H, hd), lambda b, qt: (0, 0, 0)),     # Wk_eff (constant)
            pl.BlockSpec((heads, 1, hd), lambda b, qt: (0, 0, 0)),     # bq_eff
            pl.BlockSpec((heads, 1, hd), lambda b, qt: (0, 0, 0)),     # bk_eff
            pl.BlockSpec((1, q_tile, 1), lambda b, qt: (b, qt, 0)),    # row pad term
            pl.BlockSpec((1, 1, S), lambda b, qt: (b, 0, 0)),          # col pad term
        ],
        out_specs=pl.BlockSpec((1, heads, q_tile, S), lambda b, qt: (b, 0, qt, 0)),
        scratch_shapes=[pltpu.VMEM((heads, S, hd), jnp.float32)],      # K projection
        compiler_params=pltpu.CompilerParams(
            dimension_semantics=("parallel", "arbitrary"),
            vmem_limit_bytes=vmem_limit),
    )(x, Wq_eff, Wk_eff, bq_eff, bk_eff, mrow_add, mcol_add)

    return out                                                          # [B, heads, S, S]


# ----------------------------- pure-JAX reference ----------------------------
def global_pointer_reference(x, W, bvec, mask, *, heads, head_size, max_len=64):
    B, S, H = x.shape
    hd = head_size
    so = x @ W + bvec                                  # [B, S, heads*2*hd]
    so = so.reshape(B, S, heads, 2 * hd)               # chunk + stack(dim=-2)
    qw, kw = so[..., :hd], so[..., hd:]
    cos_pos, sin_pos = make_rope_tables(max_len, hd)
    cos = cos_pos[:heads]                              # [heads, hd] (seq_dim=-2 = heads)
    sin = sin_pos[:heads]

    def rope(q):
        q2 = jnp.stack([-q[..., 1::2], q[..., 0::2]], axis=-1).reshape(q.shape)
        return q * cos + q2 * sin

    qw, kw = rope(qw), rope(kw)
    logits = jnp.einsum('bmhd,bnhd->bhmn', qw, kw)
    logits = jnp.where(mask[:, None, :, None] > 0, logits, -jnp.inf)
    logits = jnp.where(mask[:, None, None, :] > 0, logits, -jnp.inf)
    tril = jnp.tril(jnp.ones((S, S), jnp.float32), -1) * 1e12
    logits = logits - tril
    return logits / hd ** 0.5


# ----------------------------------- main ------------------------------------
if __name__ == "__main__":
    B, S, HIDDEN = 2, 8, 32
    HEADS, HEAD_SIZE, MAX_LEN = 4, 16, 64

    key = jax.random.PRNGKey(0)
    kx, kw, kb = jax.random.split(key, 3)

    x = jax.random.normal(kx, (B, S, HIDDEN), dtype=jnp.float32)
    W = jax.random.normal(kw, (HIDDEN, HEADS * HEAD_SIZE * 2), dtype=jnp.float32) * 0.02
    bvec = jax.random.normal(kb, (HEADS * HEAD_SIZE * 2,), dtype=jnp.float32) * 0.01
    # Padding mask: batch 1 has its last two tokens padded.
    mask = jnp.ones((B, S), dtype=jnp.float32).at[1, -2:].set(0.0)

    out = global_pointer_forward(x, W, bvec, mask,
                                 heads=HEADS, head_size=HEAD_SIZE, max_len=MAX_LEN)
    out = jax.block_until_ready(out)

    ref = global_pointer_reference(x, W, bvec, mask,
                                   heads=HEADS, head_size=HEAD_SIZE, max_len=MAX_LEN)
    ref = jax.block_until_ready(ref)

    assert out.shape == (B, HEADS, S, S), out.shape
    # Tolerance accounts for default (bf16-pass) matmul precision on TPU for both paths.
    if not np.allclose(np.asarray(out), np.asarray(ref), rtol=2e-2, atol=5e-3):
        raise AssertionError("Pallas kernel output mismatch vs reference")

    print("KERNEL_OK")
</pallas_src>

<mosaic_0001>
module attributes {stable_mosaic.version = 11 : i64} {
  func.func @kernel(%arg0: i32, %arg1: i32, %arg2: memref<1x8x32xf32, #tpu.memory_space<vmem>>, %arg3: memref<4x32x16xf32, #tpu.memory_space<vmem>>, %arg4: memref<4x32x16xf32, #tpu.memory_space<vmem>>, %arg5: memref<4x1x16xf32, #tpu.memory_space<vmem>>, %arg6: memref<4x1x16xf32, #tpu.memory_space<vmem>>, %arg7: memref<1x8x1xf32, #tpu.memory_space<vmem>>, %arg8: memref<1x1x8xf32, #tpu.memory_space<vmem>>, %arg9: memref<1x4x8x8xf32, #tpu.memory_space<vmem>>, %arg10: memref<4x8x16xf32, #tpu.memory_space<vmem>>) attributes {dimension_semantics = [#tpu.dimension_semantics<parallel>, #tpu.dimension_semantics<arbitrary>], iteration_bounds = array<i64: 2, 1>, scalar_prefetch = 0 : i64, scratch_operands = 1 : i64, tpu.core_type = #tpu.core_type<tc>, window_params = [{transform_indices = @transform_0, window_bounds = array<i64: 1, 8, 32>}, {pipeline_mode = #tpu.pipeline_mode<synchronous>, transform_indices = @transform_1, window_bounds = array<i64: 4, 32, 16>}, {pipeline_mode = #tpu.pipeline_mode<synchronous>, transform_indices = @transform_2, window_bounds = array<i64: 4, 32, 16>}, {pipeline_mode = #tpu.pipeline_mode<synchronous>, transform_indices = @transform_3, window_bounds = array<i64: 4, 1, 16>}, {pipeline_mode = #tpu.pipeline_mode<synchronous>, transform_indices = @transform_4, window_bounds = array<i64: 4, 1, 16>}, {transform_indices = @transform_5, window_bounds = array<i64: 1, 8, 1>}, {transform_indices = @transform_6, window_bounds = array<i64: 1, 1, 8>}, {transform_indices = @transform_7, window_bounds = array<i64: 1, 4, 8, 8>}]} {
    %c0_i32 = arith.constant 0 : i32
    %0 = arith.cmpi eq, %arg1, %c0_i32 : i32
    %1 = arith.extui %0 : i1 to i32
    %c0_i32_0 = arith.constant 0 : i32
    %2 = arith.cmpi ne, %1, %c0_i32_0 : i32
    scf.if %2 {
      %c0_66 = arith.constant 0 : index
      %c0_67 = arith.constant 0 : index
      %c0_68 = arith.constant 0 : index
      %80 = vector.load %arg2[%c0_66, %c0_67, %c0_68] : memref<1x8x32xf32, #tpu.memory_space<vmem>>, vector<1x8x32xf32>
      %81 = vector.shape_cast %80 : vector<1x8x32xf32> to vector<8x32xf32>
      %c0_69 = arith.constant 0 : index
      %c0_70 = arith.constant 0 : index
      %c0_71 = arith.constant 0 : index
      %82 = vector.load %arg4[%c0_69, %c0_70, %c0_71] : memref<4x32x16xf32, #tpu.memory_space<vmem>>, vector<1x32x16xf32>
      %83 = vector.shape_cast %82 : vector<1x32x16xf32> to vector<32x16xf32>
      %cst_72 = arith.constant dense<0.000000e+00> : vector<8x16xf32>
      %84 = tpu.matmul %81, %83, %cst_72 {dimension_numbers = #tpu.dot_dimension_numbers<[1], [0], [0], [1], [0, 0, 1, 1], [], []>} : vector<8x32xf32>, vector<32x16xf32>, vector<8x16xf32> -> vector<8x16xf32>
      %c0_73 = arith.constant 0 : index
      %c0_74 = arith.constant 0 : index
      %c0_75 = arith.constant 0 : index
      %85 = vector.load %arg6[%c0_73, %c0_74, %c0_75] : memref<4x1x16xf32, #tpu.memory_space<vmem>>, vector<1x1x16xf32>
      %86 = vector.shape_cast %85 : vector<1x1x16xf32> to vector<1x16xf32>
      %87 = vector.broadcast %86 : vector<1x16xf32> to vector<8x16xf32>
      %88 = arith.addf %84, %87 : vector<8x16xf32>
      %c0_76 = arith.constant 0 : index
      %c0_77 = arith.constant 0 : index
      %c0_78 = arith.constant 0 : index
      %89 = vector.load %arg10[%c0_76, %c0_77, %c0_78] : memref<4x8x16xf32, #tpu.memory_space<vmem>>, vector<1x8x16xf32>
      %90 = vector.shape_cast %89 : vector<1x8x16xf32> to vector<8x16xf32>
      %91 = vector.shape_cast %88 : vector<8x16xf32> to vector<1x8x16xf32>
      tpu.vector_store %arg10[%c0_76, %c0_77, %c0_78], %91 {strides = array<i32>} : memref<4x8x16xf32, #tpu.memory_space<vmem>>, vector<1x8x16xf32>,
      %c1_79 = arith.constant 1 : index
      %c0_80 = arith.constant 0 : index
      %c0_81 = arith.constant 0 : index
      %92 = vector.load %arg4[%c1_79, %c0_80, %c0_81] : memref<4x32x16xf32, #tpu.memory_space<vmem>>, vector<1x32x16xf32>
      %93 = vector.shape_cast %92 : vector<1x32x16xf32> to vector<32x16xf32>
      %cst_82 = arith.constant dense<0.000000e+00> : vector<8x16xf32>
      %94 = tpu.matmul %81, %93, %cst_82 {dimension_numbers = #tpu.dot_dimension_numbers<[1], [0], [0], [1], [0, 0, 1, 1], [], []>} : vector<8x32xf32>, vector<32x16xf32>, vector<8x16xf32> -> vector<8x16xf32>
      %c1_83 = arith.constant 1 : index
      %c0_84 = arith.constant 0 : index
      %c0_85 = arith.constant 0 : index
      %95 = vector.load %arg6[%c1_83, %c0_84, %c0_85] : memref<4x1x16xf32, #tpu.memory_space<vmem>>, vector<1x1x16xf32>
      %96 = vector.shape_cast %95 : vector<1x1x16xf32> to vector<1x16xf32>
      %97 = vector.broadcast %96 : vector<1x16xf32> to vector<8x16xf32>
      %98 = arith.addf %94, %97 : vector<8x16xf32>
      %c1_86 = arith.constant 1 : index
      %c0_87 = arith.constant 0 : index
      %c0_88 = arith.constant 0 : index
      %99 = vector.load %arg10[%c1_86, %c0_87, %c0_88] : memref<4x8x16xf32, #tpu.memory_space<vmem>>, vector<1x8x16xf32>
      %100 = vector.shape_cast %99 : vector<1x8x16xf32> to vector<8x16xf32>
      %101 = vector.shape_cast %98 : vector<8x16xf32> to vector<1x8x16xf32>
      tpu.vector_store %arg10[%c1_86, %c0_87, %c0_88], %101 {strides = array<i32>} : memref<4x8x16xf32, #tpu.memory_space<vmem>>, vector<1x8x16xf32>,
      %c2_89 = arith.constant 2 : index
      %c0_90 = arith.constant 0 : index
      %c0_91 = arith.constant 0 : index
      %102 = vector.load %arg4[%c2_89, %c0_90, %c0_91] : memref<4x32x16xf32, #tpu.memory_space<vmem>>, vector<1x32x16xf32>
      %103 = vector.shape_cast %102 : vector<1x32x16xf32> to vector<32x16xf32>
      %cst_92 = arith.constant dense<0.000000e+00> : vector<8x16xf32>
      %104 = tpu.matmul %81, %103, %cst_92 {dimension_numbers = #tpu.dot_dimension_numbers<[1], [0], [0], [1], [0, 0, 1, 1], [], []>} : vector<8x32xf32>, vector<32x16xf32>, vector<8x16xf32> -> vector<8x16xf32>
      %c2_93 = arith.constant 2 : index
      %c0_94 = arith.constant 0 : index
      %c0_95 = arith.constant 0 : index
      %105 = vector.load %arg6[%c2_93, %c0_94, %c0_95] : memref<4x1x16xf32, #tpu.memory_space<vmem>>, vector<1x1x16xf32>
      %106 = vector.shape_cast %105 : vector<1x1x16xf32> to vector<1x16xf32>
      %107 = vector.broadcast %106 : vector<1x16xf32> to vector<8x16xf32>
      %108 = arith.addf %104, %107 : vector<8x16xf32>
      %c2_96 = arith.constant 2 : index
      %c0_97 = arith.constant 0 : index
      %c0_98 = arith.constant 0 : index
      %109 = vector.load %arg10[%c2_96, %c0_97, %c0_98] : memref<4x8x16xf32, #tpu.memory_space<vmem>>, vector<1x8x16xf32>
      %110 = vector.shape_cast %109 : vector<1x8x16xf32> to vector<8x16xf32>
      %111 = vector.shape_cast %108 : vector<8x16xf32> to vector<1x8x16xf32>
      tpu.vector_store %arg10[%c2_96, %c0_97, %c0_98], %111 {strides = array<i32>} : memref<4x8x16xf32, #tpu.memory_space<vmem>>, vector<1x8x16xf32>,
      %c3_99 = arith.constant 3 : index
      %c0_100 = arith.constant 0 : index
      %c0_101 = arith.constant 0 : index
      %112 = vector.load %arg4[%c3_99, %c0_100, %c0_101] : memref<4x32x16xf32, #tpu.memory_space<vmem>>, vector<1x32x16xf32>
      %113 = vector.shape_cast %112 : vector<1x32x16xf32> to vector<32x16xf32>
      %cst_102 = arith.constant dense<0.000000e+00> : vector<8x16xf32>
      %114 = tpu.matmul %81, %113, %cst_102 {dimension_numbers = #tpu.dot_dimension_numbers<[1], [0], [0], [1], [0, 0, 1, 1], [], []>} : vector<8x32xf32>, vector<32x16xf32>, vector<8x16xf32> -> vector<8x16xf32>
      %c3_103 = arith.constant 3 : index
      %c0_104 = arith.constant 0 : index
      %c0_105 = arith.constant 0 : index
      %115 = vector.load %arg6[%c3_103, %c0_104, %c0_105] : memref<4x1x16xf32, #tpu.memory_space<vmem>>, vector<1x1x16xf32>
      %116 = vector.shape_cast %115 : vector<1x1x16xf32> to vector<1x16xf32>
      %117 = vector.broadcast %116 : vector<1x16xf32> to vector<8x16xf32>
      %118 = arith.addf %114, %117 : vector<8x16xf32>
      %c3_106 = arith.constant 3 : index
      %c0_107 = arith.constant 0 : index
      %c0_108 = arith.constant 0 : index
      %119 = vector.load %arg10[%c3_106, %c0_107, %c0_108] : memref<4x8x16xf32, #tpu.memory_space<vmem>>, vector<1x8x16xf32>
      %120 = vector.shape_cast %119 : vector<1x8x16xf32> to vector<8x16xf32>
      %121 = vector.shape_cast %118 : vector<8x16xf32> to vector<1x8x16xf32>
      tpu.vector_store %arg10[%c3_106, %c0_107, %c0_108], %121 {strides = array<i32>} : memref<4x8x16xf32, #tpu.memory_space<vmem>>, vector<1x8x16xf32>,
    } else {
    }
    %c8_i32 = arith.constant 8 : i32
    %3 = arith.muli %arg1, %c8_i32 : i32
    %4 = tpu.assume_multiple %3, 8 : i32
    %c0 = arith.constant 0 : index
    %5 = arith.index_cast %4 : i32 to index
    %c0_1 = arith.constant 0 : index
    %6 = vector.load %arg2[%c0, %5, %c0_1] : memref<1x8x32xf32, #tpu.memory_space<vmem>>, vector<1x8x32xf32>
    %7 = vector.shape_cast %6 : vector<1x8x32xf32> to vector<8x32xf32>
    %c0_2 = arith.constant 0 : index
    %c0_3 = arith.constant 0 : index
    %c0_4 = arith.constant 0 : index
    %8 = vector.load %arg7[%c0_2, %c0_3, %c0_4] : memref<1x8x1xf32, #tpu.memory_space<vmem>>, vector<1x8x1xf32>
    %9 = vector.shape_cast %8 : vector<1x8x1xf32> to vector<8x1xf32>
    %c0_5 = arith.constant 0 : index
    %c0_6 = arith.constant 0 : index
    %c0_7 = arith.constant 0 : index
    %10 = vector.load %arg8[%c0_5, %c0_6, %c0_7] : memref<1x1x8xf32, #tpu.memory_space<vmem>>, vector<1x1x8xf32>
    %11 = vector.shape_cast %10 : vector<1x1x8xf32> to vector<1x8xf32>
    %12 = vector.broadcast %9 : vector<8x1xf32> to vector<8x8xf32>
    %13 = vector.broadcast %11 : vector<1x8xf32> to vector<8x8xf32>
    %14 = arith.addf %12, %13 : vector<8x8xf32>
    %15 = tpu.iota {dimensions = array<i32: 0>} : vector<8x8xi32>
    %16 = vector.broadcast %4 : i32 to vector<8x8xi32>
    %17 = arith.addi %15, %16 : vector<8x8xi32>
    %18 = tpu.iota {dimensions = array<i32: 1>} : vector<8x8xi32>
    %19 = arith.cmpi sgt, %17, %18 : vector<8x8xi32>
    %cst = arith.constant -2.500000e+11 : f32
    %cst_8 = arith.constant 0.000000e+00 : f32
    %20 = vector.broadcast %cst : f32 to vector<8x8xf32>
    %21 = vector.broadcast %cst_8 : f32 to vector<8x8xf32>
    %22 = arith.select %19, %20, %21 : vector<8x8xi1>, vector<8x8xf32>
    %23 = arith.addf %14, %22 : vector<8x8xf32>
    %c0_9 = arith.constant 0 : index
    %c0_10 = arith.constant 0 : index
    %c0_11 = arith.constant 0 : index
    %24 = vector.load %arg3[%c0_9, %c0_10, %c0_11] : memref<4x32x16xf32, #tpu.memory_space<vmem>>, vector<1x32x16xf32>
    %25 = vector.shape_cast %24 : vector<1x32x16xf32> to vector<32x16xf32>
    %cst_12 = arith.constant dense<0.000000e+00> : vector<8x16xf32>
    %26 = tpu.matmul %7, %25, %cst_12 {dimension_numbers = #tpu.dot_dimension_numbers<[1], [0], [0], [1], [0, 0, 1, 1], [], []>} : vector<8x32xf32>, vector<32x16xf32>, vector<8x16xf32> -> vector<8x16xf32>
    %c0_13 = arith.constant 0 : index
    %c0_14 = arith.constant 0 : index
    %c0_15 = arith.constant 0 : index
    %27 = vector.load %arg5[%c0_13, %c0_14, %c0_15] : memref<4x1x16xf32, #tpu.memory_space<vmem>>, vector<1x1x16xf32>
    %28 = vector.shape_cast %27 : vector<1x1x16xf32> to vector<1x16xf32>
    %29 = vector.broadcast %28 : vector<1x16xf32> to vector<8x16xf32>
    %30 = arith.addf %26, %29 : vector<8x16xf32>
    %c0_16 = arith.constant 0 : index
    %c0_17 = arith.constant 0 : index
    %c0_18 = arith.constant 0 : index
    %31 = vector.load %arg10[%c0_16, %c0_17, %c0_18] : memref<4x8x16xf32, #tpu.memory_space<vmem>>, vector<1x8x16xf32>
    %32 = vector.shape_cast %31 : vector<1x8x16xf32> to vector<8x16xf32>
    %cst_19 = arith.constant dense<0.000000e+00> : vector<8x8xf32>
    %33 = tpu.matmul %30, %32, %cst_19 {dimension_numbers = #tpu.dot_dimension_numbers<[1], [1], [0], [0], [0, 0, 1, 0], [], []>} : vector<8x16xf32>, vector<8x16xf32>, vector<8x8xf32> -> vector<8x8xf32>
    %34 = arith.addf %33, %23 : vector<8x8xf32>
    %c0_20 = arith.constant 0 : index
    %c0_21 = arith.constant 0 : index
    %c0_22 = arith.constant 0 : index
    %c0_23 = arith.constant 0 : index
    %35 = vector.load %arg9[%c0_20, %c0_21, %c0_22, %c0_23] : memref<1x4x8x8xf32, #tpu.memory_space<vmem>>, vector<1x1x8x8xf32>
    %36 = vector.shape_cast %35 : vector<1x1x8x8xf32> to vector<8x8xf32>
    %37 = vector.shape_cast %34 : vector<8x8xf32> to vector<1x1x8x8xf32>
    tpu.vector_store %arg9[%c0_20, %c0_21, %c0_22, %c0_23], %37 {strides = array<i32>} : memref<1x4x8x8xf32, #tpu.memory_space<vmem>>, vector<1x1x8x8xf32>,
    %c1 = arith.constant 1 : index
    %c0_24 = arith.constant 0 : index
    %c0_25 = arith.constant 0 : index
    %38 = vector.load %arg3[%c1, %c0_24, %c0_25] : memref<4x32x16xf32, #tpu.memory_space<vmem>>, vector<1x32x16xf32>
    %39 = vector.shape_cast %38 : vector<1x32x16xf32> to vector<32x16xf32>
    %cst_26 = arith.constant dense<0.000000e+00> : vector<8x16xf32>
    %40 = tpu.matmul %7, %39, %cst_26 {dimension_numbers = #tpu.dot_dimension_numbers<[1], [0], [0], [1], [0, 0, 1, 1], [], []>} : vector<8x32xf32>, vector<32x16xf32>, vector<8x16xf32> -> vector<8x16xf32>
    %c1_27 = arith.constant 1 : index
    %c0_28 = arith.constant 0 : index
    %c0_29 = arith.constant 0 : index
    %41 = vector.load %arg5[%c1_27, %c0_28, %c0_29] : memref<4x1x16xf32, #tpu.memory_space<vmem>>, vector<1x1x16xf32>
    %42 = vector.shape_cast %41 : vector<1x1x16xf32> to vector<1x16xf32>
    %43 = vector.broadcast %42 : vector<1x16xf32> to vector<8x16xf32>
    %44 = arith.addf %40, %43 : vector<8x16xf32>
    %c1_30 = arith.constant 1 : index
    %c0_31 = arith.constant 0 : index
    %c0_32 = arith.constant 0 : index
    %45 = vector.load %arg10[%c1_30, %c0_31, %c0_32] : memref<4x8x16xf32, #tpu.memory_space<vmem>>, vector<1x8x16xf32>
    %46 = vector.shape_cast %45 : vector<1x8x16xf32> to vector<8x16xf32>
    %cst_33 = arith.constant dense<0.000000e+00> : vector<8x8xf32>
    %47 = tpu.matmul %44, %46, %cst_33 {dimension_numbers = #tpu.dot_dimension_numbers<[1], [1], [0], [0], [0, 0, 1, 0], [], []>} : vector<8x16xf32>, vector<8x16xf32>, vector<8x8xf32> -> vector<8x8xf32>
    %48 = arith.addf %47, %23 : vector<8x8xf32>
    %c0_34 = arith.constant 0 : index
    %c1_35 = arith.constant 1 : index
    %c0_36 = arith.constant 0 : index
    %c0_37 = arith.constant 0 : index
    %49 = vector.load %arg9[%c0_34, %c1_35, %c0_36, %c0_37] : memref<1x4x8x8xf32, #tpu.memory_space<vmem>>, vector<1x1x8x8xf32>
    %50 = vector.shape_cast %49 : vector<1x1x8x8xf32> to vector<8x8xf32>
    %51 = vector.shape_cast %48 : vector<8x8xf32> to vector<1x1x8x8xf32>
    tpu.vector_store %arg9[%c0_34, %c1_35, %c0_36, %c0_37], %51 {strides = array<i32>} : memref<1x4x8x8xf32, #tpu.memory_space<vmem>>, vector<1x1x8x8xf32>,
    %c2 = arith.constant 2 : index
    %c0_38 = arith.constant 0 : index
    %c0_39 = arith.constant 0 : index
    %52 = vector.load %arg3[%c2, %c0_38, %c0_39] : memref<4x32x16xf32, #tpu.memory_space<vmem>>, vector<1x32x16xf32>
    %53 = vector.shape_cast %52 : vector<1x32x16xf32> to vector<32x16xf32>
    %cst_40 = arith.constant dense<0.000000e+00> : vector<8x16xf32>
    %54 = tpu.matmul %7, %53, %cst_40 {dimension_numbers = #tpu.dot_dimension_numbers<[1], [0], [0], [1], [0, 0, 1, 1], [], []>} : vector<8x32xf32>, vector<32x16xf32>, vector<8x16xf32> -> vector<8x16xf32>
    %c2_41 = arith.constant 2 : index
    %c0_42 = arith.constant 0 : index
    %c0_43 = arith.constant 0 : index
    %55 = vector.load %arg5[%c2_41, %c0_42, %c0_43] : memref<4x1x16xf32, #tpu.memory_space<vmem>>, vector<1x1x16xf32>
    %56 = vector.shape_cast %55 : vector<1x1x16xf32> to vector<1x16xf32>
    %57 = vector.broadcast %56 : vector<1x16xf32> to vector<8x16xf32>
    %58 = arith.addf %54, %57 : vector<8x16xf32>
    %c2_44 = arith.constant 2 : index
    %c0_45 = arith.constant 0 : index
    %c0_46 = arith.constant 0 : index
    %59 = vector.load %arg10[%c2_44, %c0_45, %c0_46] : memref<4x8x16xf32, #tpu.memory_space<vmem>>, vector<1x8x16xf32>
    %60 = vector.shape_cast %59 : vector<1x8x16xf32> to vector<8x16xf32>
    %cst_47 = arith.constant dense<0.000000e+00> : vector<8x8xf32>
    %61 = tpu.matmul %58, %60, %cst_47 {dimension_numbers = #tpu.dot_dimension_numbers<[1], [1], [0], [0], [0, 0, 1, 0], [], []>} : vector<8x16xf32>, vector<8x16xf32>, vector<8x8xf32> -> vector<8x8xf32>
    %62 = arith.addf %61, %23 : vector<8x8xf32>
    %c0_48 = arith.constant 0 : index
    %c2_49 = arith.constant 2 : index
    %c0_50 = arith.constant 0 : index
    %c0_51 = arith.constant 0 : index
    %63 = vector.load %arg9[%c0_48, %c2_49, %c0_50, %c0_51] : memref<1x4x8x8xf32, #tpu.memory_space<vmem>>, vector<1x1x8x8xf32>
    %64 = vector.shape_cast %63 : vector<1x1x8x8xf32> to vector<8x8xf32>
    %65 = vector.shape_cast %62 : vector<8x8xf32> to vector<1x1x8x8xf32>
    tpu.vector_store %arg9[%c0_48, %c2_49, %c0_50, %c0_51], %65 {strides = array<i32>} : memref<1x4x8x8xf32, #tpu.memory_space<vmem>>, vector<1x1x8x8xf32>,
    %c3 = arith.constant 3 : index
    %c0_52 = arith.constant 0 : index
    %c0_53 = arith.constant 0 : index
    %66 = vector.load %arg3[%c3, %c0_52, %c0_53] : memref<4x32x16xf32, #tpu.memory_space<vmem>>, vector<1x32x16xf32>
    %67 = vector.shape_cast %66 : vector<1x32x16xf32> to vector<32x16xf32>
    %cst_54 = arith.constant dense<0.000000e+00> : vector<8x16xf32>
    %68 = tpu.matmul %7, %67, %cst_54 {dimension_numbers = #tpu.dot_dimension_numbers<[1], [0], [0], [1], [0, 0, 1, 1], [], []>} : vector<8x32xf32>, vector<32x16xf32>, vector<8x16xf32> -> vector<8x16xf32>
    %c3_55 = arith.constant 3 : index
    %c0_56 = arith.constant 0 : index
    %c0_57 = arith.constant 0 : index
    %69 = vector.load %arg5[%c3_55, %c0_56, %c0_57] : memref<4x1x16xf32, #tpu.memory_space<vmem>>, vector<1x1x16xf32>
    %70 = vector.shape_cast %69 : vector<1x1x16xf32> to vector<1x16xf32>
    %71 = vector.broadcast %70 : vector<1x16xf32> to vector<8x16xf32>
    %72 = arith.addf %68, %71 : vector<8x16xf32>
    %c3_58 = arith.constant 3 : index
    %c0_59 = arith.constant 0 : index
    %c0_60 = arith.constant 0 : index
    %73 = vector.load %arg10[%c3_58, %c0_59, %c0_60] : memref<4x8x16xf32, #tpu.memory_space<vmem>>, vector<1x8x16xf32>
    %74 = vector.shape_cast %73 : vector<1x8x16xf32> to vector<8x16xf32>
    %cst_61 = arith.constant dense<0.000000e+00> : vector<8x8xf32>
    %75 = tpu.matmul %72, %74, %cst_61 {dimension_numbers = #tpu.dot_dimension_numbers<[1], [1], [0], [0], [0, 0, 1, 0], [], []>} : vector<8x16xf32>, vector<8x16xf32>, vector<8x8xf32> -> vector<8x8xf32>
    %76 = arith.addf %75, %23 : vector<8x8xf32>
    %c0_62 = arith.constant 0 : index
    %c3_63 = arith.constant 3 : index
    %c0_64 = arith.constant 0 : index
    %c0_65 = arith.constant 0 : index
    %77 = vector.load %arg9[%c0_62, %c3_63, %c0_64, %c0_65] : memref<1x4x8x8xf32, #tpu.memory_space<vmem>>, vector<1x1x8x8xf32>
    %78 = vector.shape_cast %77 : vector<1x1x8x8xf32> to vector<8x8xf32>
    %79 = vector.shape_cast %76 : vector<8x8xf32> to vector<1x1x8x8xf32>
    tpu.vector_store %arg9[%c0_62, %c3_63, %c0_64, %c0_65], %79 {strides = array<i32>} : memref<1x4x8x8xf32, #tpu.memory_space<vmem>>, vector<1x1x8x8xf32>,
    return
  }
  func.func @transform_0(%arg0: i32, %arg1: i32) -> (i32, i32, i32) {
    %c0_i32 = arith.constant 0 : i32
    %c0_i32_0 = arith.constant 0 : i32
    %c0_i32_1 = arith.constant 0 : i32
    return %arg0, %c0_i32, %c0_i32_0 : i32, i32, i32
  }
  func.func @transform_1(%arg0: i32, %arg1: i32) -> (i32, i32, i32) {
    %c0_i32 = arith.constant 0 : i32
    %c0_i32_0 = arith.constant 0 : i32
    %c0_i32_1 = arith.constant 0 : i32
    %c0_i32_2 = arith.constant 0 : i32
    return %c0_i32, %c0_i32_0, %c0_i32_1 : i32, i32, i32
  }
  func.func @transform_2(%arg0: i32, %arg1: i32) -> (i32, i32, i32) {
    %c0_i32 = arith.constant 0 : i32
    %c0_i32_0 = arith.constant 0 : i32
    %c0_i32_1 = arith.constant 0 : i32
    %c0_i32_2 = arith.constant 0 : i32
    return %c0_i32, %c0_i32_0, %c0_i32_1 : i32, i32, i32
  }
  func.func @transform_3(%arg0: i32, %arg1: i32) -> (i32, i32, i32) {
    %c0_i32 = arith.constant 0 : i32
    %c0_i32_0 = arith.constant 0 : i32
    %c0_i32_1 = arith.constant 0 : i32
    %c0_i32_2 = arith.constant 0 : i32
    return %c0_i32, %c0_i32_0, %c0_i32_1 : i32, i32, i32
  }
  func.func @transform_4(%arg0: i32, %arg1: i32) -> (i32, i32, i32) {
    %c0_i32 = arith.constant 0 : i32
    %c0_i32_0 = arith.constant 0 : i32
    %c0_i32_1 = arith.constant 0 : i32
    %c0_i32_2 = arith.constant 0 : i32
    return %c0_i32, %c0_i32_0, %c0_i32_1 : i32, i32, i32
  }
  func.func @transform_5(%arg0: i32, %arg1: i32) -> (i32, i32, i32) {
    %c0_i32 = arith.constant 0 : i32
    %c0_i32_0 = arith.constant 0 : i32
    return %arg0, %arg1, %c0_i32 : i32, i32, i32
  }
  func.func @transform_6(%arg0: i32, %arg1: i32) -> (i32, i32, i32) {
    %c0_i32 = arith.constant 0 : i32
    %c0_i32_0 = arith.constant 0 : i32
    %c0_i32_1 = arith.constant 0 : i32
    return %arg0, %c0_i32, %c0_i32_0 : i32, i32, i32
  }
  func.func @transform_7(%arg0: i32, %arg1: i32) -> (i32, i32, i32, i32) {
    %c0_i32 = arith.constant 0 : i32
    %c0_i32_0 = arith.constant 0 : i32
    %c0_i32_1 = arith.constant 0 : i32
    return %arg0, %c0_i32, %arg1, %c0_i32_0 : i32, i32, i32, i32
  }
}

</mosaic_0001>

<llo_original>
// kernel: tpu_custom_call.1
$region0: #{tpu_custom_call.1}
  #allocation0 [shape = 'u32[]', space=smem, size = 0x4, offset = 0x4, fixed_abs, tag = 'smem constant byte address 0x4 - core index']
  #allocation1 [shape = 'u32[144,128]{1,0:T(1,128)}', space=vmem, size = 0x12000, scoped, tag = 'internal scratch']
  #allocation2 [shape = 'f32[4,8,16]{2,1,0:T(8,128)}', space=vmem, size = 0x4000, scoped, tag = 'scratch operand']
  %s0 = inlined_call_operand.vmem [shape: f32[2,8,32], index: 0, kind: input, shape index: {}]
  %s1 = inlined_call_operand.vmem [shape: f32[4,32,16], index: 1, kind: input, shape index: {}]
  %s2 = inlined_call_operand.vmem [shape: f32[4,32,16], index: 2, kind: input, shape index: {}]
  %s3 = inlined_call_operand.vmem [shape: f32[4,1,16], index: 3, kind: input, shape index: {}]
  %s4 = inlined_call_operand.vmem [shape: f32[4,1,16], index: 4, kind: input, shape index: {}]
  %s5 = inlined_call_operand.vmem [shape: f32[2,8,1], index: 5, kind: input, shape index: {}]
  %s6 = inlined_call_operand.vmem [shape: f32[2,1,8], index: 6, kind: input, shape index: {}]
  %s7 = inlined_call_operand.hbm [shape: f32[2,4,8,8], index: 7, kind: output, shape index: {}]
  %s8 = sld [smem:[#allocation0]]
  $region65: #{tpu_custom_call.1} parent=0
    _
  %s10 = ssub.s32 1, %s8
  %s11 = scalar_select 0, %s10, %s8
  $region1: #{tpu_custom_call.1} parent=0
    #allocation3 [shape = 'u8[32768]{0}', space=vmem, size = 0x8000, scoped, tag = 'output window, operand 0']
    #allocation4 [shape = 's32[2]{0}', space=sflag, size = 0x8, scoped, tag = 'scoped memory for tpu_custom_call.1']
    %12 = vsyncpa [#allocation4], 0
    %s13 = scalar_lea.sflag [#allocation4], 1
    %14 = vsyncpa %s13, 0
    loop: start=0, step=1, limit=4
    $region2: #{tpu_custom_call.1} parent=1 // loop_pre_header
      _
    $region3: #{tpu_custom_call.1} parent=1 // loop_header
      %s16 = sphi 0, %s20
      %p17 = scmp.ge.s32.totalorder %s16, 4
      %s23 = sphi 0, %s35
      %s24 = sphi 0, %s31
      %s25 = sphi 0, %s23
      %s26 = sphi 0, %s24
      %s27 = sphi 0, %s25
      %s28 = sphi 0, %s26
      %s38 = sphi 0, %s40
      %s41 = sphi 0, %s38
      %s42 = sphi 0, %s41
      %s58 = sphi 0, %s42
      %s62 = sphi 0, %s62
      %s64 = sphi 0, %s62
      %s65 = sphi 0, %s64
      %s79 = sphi 0, %s65
      %s83 = sphi 0, %s83
      %s85 = sphi 0, %s83
      %s86 = sphi 0, %s85
      %s100 = sphi 0, %s86
      %s104 = sphi 0, %s104
      %s106 = sphi 0, %s104
      %s107 = sphi 0, %s106
      %s121 = sphi 0, %s107
      %s125 = sphi 0, %s125
      %s127 = sphi 0, %s125
      %s128 = sphi 0, %s127
      %s142 = sphi 0, %s128
      %s150 = sphi 0, %s152
      %s153 = sphi 0, %s150
      %s154 = sphi 0, %s153
      %s170 = sphi 0, %s154
      %s176 = sphi 0, %s178
      %s179 = sphi 0, %s176
      %s180 = sphi 0, %s179
      %s196 = sphi 0, %s180
      %s204 = sphi 0, %s206
      %s207 = sphi 0, %s204
      %s208 = sphi 0, %s207
      %s224 = sphi 0, %s208
    $region4: #{tpu_custom_call.1} parent=1 // loop_header_branch
      %19 = sbr.rel (%p17) target = $region8
    $region5: #{tpu_custom_call.1} parent=1 // loop_body
      %s21 = ssub.s32 %s16, 1
      %s22 = ssub.s32 %s16, 2
      %s29 = sadd.s32 1, %s24
      %p30 = scmp.ge.s32.totalorder %s29, 1
      %s31 = scalar_select %p30, 0, %s29
      %s32 = sadd.s32 1, %s23
      %s33 = scalar_select %p30, %s32, %s23
      %p34 = scmp.ge.s32.totalorder %s33, 2
      %s35 = scalar_select %p34, 0, %s33
      %s36 = ssub.s32 %s23, %s35
      %p37 = scmp.eq.s32.totalorder %s36, 0
      %s39 = sadd.s32 %s38, 1
      %s40 = scalar_select %p37, %s38, %s39
      %p43 = pneg %p37
      %p44 = scmp.eq.s32.totalorder %s16, 1
      %p45 = por %p43, %p44
      %p46 = scmp.ne.s32.totalorder %s38, %s41
      %p47 = scmp.eq.s32.totalorder %s16, 0
      %p48 = por %p46, %p47
      %p49 = scmp.ne.s32.totalorder %s38, %s41
      %p50 = scmp.eq.s32.totalorder %s21, 1
      %p51 = por %p49, %p50
      %p52 = scmp.ne.s32.totalorder %s41, %s42
      %p53 = scmp.eq.s32.totalorder %s21, 0
      %p54 = por %p52, %p53
      %p55 = scmp.ne.s32.totalorder %s41, %s42
      %p56 = scmp.eq.s32.totalorder %s22, 1
      %p57 = por %p55, %p56
      %p59 = scmp.ne.s32.totalorder %s42, %s58
      %p60 = scmp.eq.s32.totalorder %s22, 0
      %p61 = por %p59, %p60
      %s63 = sadd.s32 %s62, 1
      %p66 = scmp.eq.s32.totalorder %s16, 1
      %p67 = scmp.ne.s32.totalorder %s62, %s64
      %p68 = scmp.eq.s32.totalorder %s16, 0
      %p69 = por %p67, %p68
      %p70 = scmp.ne.s32.totalorder %s62, %s64
      %p71 = scmp.eq.s32.totalorder %s21, 1
      %p72 = por %p70, %p71
      %p73 = scmp.ne.s32.totalorder %s64, %s65
      %p74 = scmp.eq.s32.totalorder %s21, 0
      %p75 = por %p73, %p74
      %p76 = scmp.ne.s32.totalorder %s64, %s65
      %p77 = scmp.eq.s32.totalorder %s22, 1
      %p78 = por %p76, %p77
      %p80 = scmp.ne.s32.totalorder %s65, %s79
      %p81 = scmp.eq.s32.totalorder %s22, 0
      %p82 = por %p80, %p81
      %s84 = sadd.s32 %s83, 1
      %p87 = scmp.eq.s32.totalorder %s16, 1
      %p88 = scmp.ne.s32.totalorder %s83, %s85
      %p89 = scmp.eq.s32.totalorder %s16, 0
      %p90 = por %p88, %p89
      %p91 = scmp.ne.s32.totalorder %s83, %s85
      %p92 = scmp.eq.s32.totalorder %s21, 1
      %p93 = por %p91, %p92
      %p94 = scmp.ne.s32.totalorder %s85, %s86
      %p95 = scmp.eq.s32.totalorder %s21, 0
      %p96 = por %p94, %p95
      %p97 = scmp.ne.s32.totalorder %s85, %s86
      %p98 = scmp.eq.s32.totalorder %s22, 1
      %p99 = por %p97, %p98
      %p101 = scmp.ne.s32.totalorder %s86, %s100
      %p102 = scmp.eq.s32.totalorder %s22, 0
      %p103 = por %p101, %p102
      %s105 = sadd.s32 %s104, 1
      %p108 = scmp.eq.s32.totalorder %s16, 1
      %p109 = scmp.ne.s32.totalorder %s104, %s106
      %p110 = scmp.eq.s32.totalorder %s16, 0
      %p111 = por %p109, %p110
      %p112 = scmp.ne.s32.totalorder %s104, %s106
      %p113 = scmp.eq.s32.totalorder %s21, 1
      %p114 = por %p112, %p113
      %p115 = scmp.ne.s32.totalorder %s106, %s107
      %p116 = scmp.eq.s32.totalorder %s21, 0
      %p117 = por %p115, %p116
      %p118 = scmp.ne.s32.totalorder %s106, %s107
      %p119 = scmp.eq.s32.totalorder %s22, 1
      %p120 = por %p118, %p119
      %p122 = scmp.ne.s32.totalorder %s107, %s121
      %p123 = scmp.eq.s32.totalorder %s22, 0
      %p124 = por %p122, %p123
      %s126 = sadd.s32 %s125, 1
      %p129 = scmp.eq.s32.totalorder %s16, 1
      %p130 = scmp.ne.s32.totalorder %s125, %s127
      %p131 = scmp.eq.s32.totalorder %s16, 0
      %p132 = por %p130, %p131
      %p133 = scmp.ne.s32.totalorder %s125, %s127
      %p134 = scmp.eq.s32.totalorder %s21, 1
      %p135 = por %p133, %p134
      %p136 = scmp.ne.s32.totalorder %s127, %s128
      %p137 = scmp.eq.s32.totalorder %s21, 0
      %p138 = por %p136, %p137
      %p139 = scmp.ne.s32.totalorder %s127, %s128
      %p140 = scmp.eq.s32.totalorder %s22, 1
      %p141 = por %p139, %p140
      %p143 = scmp.ne.s32.totalorder %s128, %s142
      %p144 = scmp.eq.s32.totalorder %s22, 0
      %p145 = por %p143, %p144
      %s146 = ssub.s32 %s23, %s35
      %s147 = ssub.s32 %s24, %s31
      %s148 = sor.u32 %s146, %s147
      %p149 = scmp.eq.s32.totalorder %s148, 0
      %s151 = sadd.s32 %s150, 1
      %s152 = scalar_select %p149, %s150, %s151
      %p155 = pneg %p149
      %p156 = scmp.eq.s32.totalorder %s16, 1
      %p157 = por %p155, %p156
      %p158 = scmp.ne.s32.totalorder %s150, %s153
      %p159 = scmp.eq.s32.totalorder %s16, 0
      %p160 = por %p158, %p159
      %p161 = scmp.ne.s32.totalorder %s150, %s153
      %p162 = scmp.eq.s32.totalorder %s21, 1
      %p163 = por %p161, %p162
      %p164 = scmp.ne.s32.totalorder %s153, %s154
      %p165 = scmp.eq.s32.totalorder %s21, 0
      %p166 = por %p164, %p165
      %p167 = scmp.ne.s32.totalorder %s153, %s154
      %p168 = scmp.eq.s32.totalorder %s22, 1
      %p169 = por %p167, %p168
      %p171 = scmp.ne.s32.totalorder %s154, %s170
      %p172 = scmp.eq.s32.totalorder %s22, 0
      %p173 = por %p171, %p172
      %s174 = ssub.s32 %s23, %s35
      %p175 = scmp.eq.s32.totalorder %s174, 0
      %s177 = sadd.s32 %s176, 1
      %s178 = scalar_select %p175, %s176, %s177
      %p181 = pneg %p175
      %p182 = scmp.eq.s32.totalorder %s16, 1
      %p183 = por %p181, %p182
      %p184 = scmp.ne.s32.totalorder %s176, %s179
      %p185 = scmp.eq.s32.totalorder %s16, 0
      %p186 = por %p184, %p185
      %p187 = scmp.ne.s32.totalorder %s176, %s179
      %p188 = scmp.eq.s32.totalorder %s21, 1
      %p189 = por %p187, %p188
      %p190 = scmp.ne.s32.totalorder %s179, %s180
      %p191 = scmp.eq.s32.totalorder %s21, 0
      %p192 = por %p190, %p191
      %p193 = scmp.ne.s32.totalorder %s179, %s180
      %p194 = scmp.eq.s32.totalorder %s22, 1
      %p195 = por %p193, %p194
      %p197 = scmp.ne.s32.totalorder %s180, %s196
      %p198 = scmp.eq.s32.totalorder %s22, 0
      %p199 = por %p197, %p198
      %s200 = ssub.s32 %s23, %s35
      %s201 = ssub.s32 %s24, %s31
      %s202 = sor.u32 %s200, %s201
      %p203 = scmp.eq.s32.totalorder %s202, 0
      %s205 = sadd.s32 %s204, 1
      %s206 = scalar_select %p203, %s204, %s205
      %p209 = pneg %p203
      %p210 = scmp.eq.s32.totalorder %s16, 1
      %p211 = por %p209, %p210
      %p212 = scmp.ne.s32.totalorder %s204, %s207
      %p213 = scmp.eq.s32.totalorder %s16, 0
      %p214 = por %p212, %p213
      %p215 = scmp.ne.s32.totalorder %s204, %s207
      %p216 = scmp.eq.s32.totalorder %s21, 1
      %p217 = por %p215, %p216
      %p218 = scmp.ne.s32.totalorder %s207, %s208
      %p219 = scmp.eq.s32.totalorder %s21, 0
      %p220 = por %p218, %p219
      %p221 = scmp.ne.s32.totalorder %s207, %s208
      %p222 = scmp.eq.s32.totalorder %s22, 1
      %p223 = por %p221, %p222
      %p225 = scmp.ne.s32.totalorder %s208, %s224
      %p226 = scmp.eq.s32.totalorder %s22, 0
      %p227 = por %p225, %p226
      %p228 = scmp.le.s32.totalorder 1, %s16
      %p229 = scmp.lt.s32.totalorder %s16, 3
      %p230 = pnand %p228, %p229
      %p231 = pneg %p230
      // Predicated region
      $region9: #{tpu_custom_call.1} parent=5 // pred_check
        _
      $region10: #{tpu_custom_call.1} parent=5 // pred_check_branch
        %233 = sbr.rel (%p230) target = $region12
      $region11: #{tpu_custom_call.1} parent=5 // pred_region
        %s234 = ssub.s32 %s16, 1
        // Predicated region
        $region13: #{tpu_custom_call.1} parent=11 // pred_check
          %p235 = pneg %p75
        $region14: #{tpu_custom_call.1} parent=11 // pred_check_branch
          %237 = sbr.rel (%p235) target = $region16
        $region15: #{tpu_custom_call.1} parent=11 // pred_region
          _
        $region16: #{tpu_custom_call.1} parent=11 // pred_fallthru
          _
        // Predicated region
        $region17: #{tpu_custom_call.1} parent=11 // pred_check
          %p238 = pneg %p96
        $region18: #{tpu_custom_call.1} parent=11 // pred_check_branch
          %240 = sbr.rel (%p238) target = $region20
        $region19: #{tpu_custom_call.1} parent=11 // pred_region
          _
        $region20: #{tpu_custom_call.1} parent=11 // pred_fallthru
          _
        // Predicated region
        $region21: #{tpu_custom_call.1} parent=11 // pred_check
          %p241 = pneg %p117
        $region22: #{tpu_custom_call.1} parent=11 // pred_check_branch
          %243 = sbr.rel (%p241) target = $region24
        $region23: #{tpu_custom_call.1} parent=11 // pred_region
          _
        $region24: #{tpu_custom_call.1} parent=11 // pred_fallthru
          _
        // Predicated region
        $region25: #{tpu_custom_call.1} parent=11 // pred_check
          %p244 = pneg %p138
        $region26: #{tpu_custom_call.1} parent=11 // pred_check_branch
          %246 = sbr.rel (%p244) target = $region28
        $region27: #{tpu_custom_call.1} parent=11 // pred_region
          _
        $region28: #{tpu_custom_call.1} parent=11 // pred_fallthru
          _
      $region12: #{tpu_custom_call.1} parent=5 // pred_fallthru
        _
      %p247 = scmp.lt.s32.totalorder %s16, 2
      // Predicated region
      $region29: #{tpu_custom_call.1} parent=5 // pred_check
        %p248 = pneg %p247
      $region30: #{tpu_custom_call.1} parent=5 // pred_check_branch
        %250 = sbr.rel (%p248) target = $region32
      $region31: #{tpu_custom_call.1} parent=5 // pred_region
        // Predicated region
        $region33: #{tpu_custom_call.1} parent=31 // pred_check
          %p251 = pneg %p48
        $region34: #{tpu_custom_call.1} parent=31 // pred_check_branch
          %253 = sbr.rel (%p251) target = $region36
        $region35: #{tpu_custom_call.1} parent=31 // pred_region
          %p254 = scmp.lt.s32.totalorder %s23, 1
          %s255 = scalar_select %p254, %s23, 1
          %s256 = smul.addr %s255, 8
          %s257 = scalar_lea.vmem %s0, %s256
        $region36: #{tpu_custom_call.1} parent=31 // pred_fallthru
          _
        // Predicated region
        $region37: #{tpu_custom_call.1} parent=31 // pred_check
          %p258 = pneg %p160
        $region38: #{tpu_custom_call.1} parent=31 // pred_check_branch
          %260 = sbr.rel (%p258) target = $region40
        $region39: #{tpu_custom_call.1} parent=31 // pred_region
          %p261 = scmp.lt.s32.totalorder %s23, 1
          %s262 = scalar_select %p261, %s23, 1
          %p263 = scmp.lt.s32.totalorder %s24, 0
          %s264 = scalar_select %p263, %s24, 0
          %s265 = sadd.s32 %s264, %s262
          %s266 = smul.addr %s265, 8
          %s267 = scalar_lea.vmem %s5, %s266
        $region40: #{tpu_custom_call.1} parent=31 // pred_fallthru
          _
        // Predicated region
        $region41: #{tpu_custom_call.1} parent=31 // pred_check
          %p268 = pneg %p186
        $region42: #{tpu_custom_call.1} parent=31 // pred_check_branch
          %270 = sbr.rel (%p268) target = $region44
        $region43: #{tpu_custom_call.1} parent=31 // pred_region
          %p271 = scmp.lt.s32.totalorder %s23, 1
          %s272 = scalar_select %p271, %s23, 1
          %s273 = scalar_lea.vmem %s6, %s272
        $region44: #{tpu_custom_call.1} parent=31 // pred_fallthru
          _
      $region32: #{tpu_custom_call.1} parent=5 // pred_fallthru
        _
      %p274 = scmp.le.s32.totalorder 1, %s16
      %p275 = scmp.lt.s32.totalorder %s16, 3
      %p276 = pnand %p274, %p275
      %p277 = pneg %p276
      // Predicated region
      $region45: #{tpu_custom_call.1} parent=5 // pred_check
        _
      $region46: #{tpu_custom_call.1} parent=5 // pred_check_branch
        %279 = sbr.rel (%p276) target = $region48
      $region47: #{tpu_custom_call.1} parent=5 // pred_region
        %s280 = ssub.s32 %s16, 1
        %p281 = scmp.lt.s32.totalorder %s25, 1
        %s282 = scalar_select %p281, %s25, 1
        %s283 = smul.addr %s282, 8
        %s284 = scalar_lea.vmem %s0, %s283
        %p285 = pneg %p54
        %p286 = pneg %p51
        %p287 = pneg %p75
        %p288 = pneg %p72
        %p289 = pneg %p96
        %p290 = pneg %p93
        %p291 = pneg %p117
        %p292 = pneg %p114
        %p293 = pneg %p138
        %p294 = pneg %p135
        %p295 = scmp.lt.s32.totalorder %s25, 1
        %s296 = scalar_select %p295, %s25, 1
        %p297 = scmp.lt.s32.totalorder %s26, 0
        %s298 = scalar_select %p297, %s26, 0
        %s299 = sadd.s32 %s298, %s296
        %s300 = smul.addr %s299, 8
        %s301 = scalar_lea.vmem %s5, %s300
        %p302 = pneg %p166
        %p303 = pneg %p163
        %p304 = scmp.lt.s32.totalorder %s25, 1
        %s305 = scalar_select %p304, %s25, 1
        %s306 = scalar_lea.vmem %s6, %s305
        %p307 = pneg %p192
        %p308 = pneg %p189
        %p309 = pneg %p220
        %p310 = pneg %p217
        %s311 = sand.u32 %s207, 1
        %s312 = scalar_lea.sflag [#allocation4], %s311
        %s313 = sand.u32 %s207, 1
        %s314 = smul.addr %s313, 32
        %s315 = scalar_lea.vmem [#allocation3], %s314
        %p316 = scmp.lt.s32.totalorder %s25, 1
        %s317 = scalar_select %p316, %s25, 1
        %s318 = smul.addr %s317, 8
        %s319 = scalar_lea.vmem %s0, %s318
        %p320 = scmp.lt.s32.totalorder %s25, 1
        %s321 = scalar_select %p320, %s25, 1
        %p322 = scmp.lt.s32.totalorder %s26, 0
        %s323 = scalar_select %p322, %s26, 0
        %s324 = sadd.s32 %s323, %s321
        %s325 = smul.addr %s324, 8
        %s326 = scalar_lea.vmem %s5, %s325
        %p327 = scmp.lt.s32.totalorder %s25, 1
        %s328 = scalar_select %p327, %s25, 1
        %s329 = scalar_lea.vmem %s6, %s328
        %p330 = scmp.eq.s32.totalorder %s26, 0
        // Predicated region
        $region49: #{tpu_custom_call.1} parent=47 // pred_check
          %p331 = pneg %p330
        $region50: #{tpu_custom_call.1} parent=47 // pred_check_branch
          %333 = sbr.rel (%p331) target = $region52
        $region51: #{tpu_custom_call.1} parent=47 // pred_region
          %v334 = vld [vmem:[%s319] sm:$0xff]
          %v335 = vld [vmem:[%s2] sm:$0xff]
          %v336 = vld [vmem:[%s2 + $0x8] sm:$0xff]
          %v337 = vld [vmem:[%s2 + $0x10] sm:$0xff]
          %v338 = vld [vmem:[%s2 + $0x18] sm:$0xff]
          %v339 = vld [vmem:[%s4] sm:$0x1]
          %v341 = vlaneseq
          %v342 = vshrl.u32 %v341, 7
          %v343 = vsub.s32 0, %v342
          %v344 = vrot.slane %v339, %v343
          %vm346 = vcmask 261120
          %v348 = vsel %vm346, %v334, 0
          %350 = vmatprep.subr.mxu0 0.0
          %351 = vmatpush1.msra.mxu0 %v335
          %352 = vmatprep.subr.mxu0 0.0
          %353 = vmatpush1.msra.mxu0 %v336
          %354 = vmatprep.subr.mxu0 0.0
          %355 = vmatpush1.msra.mxu0 %v337
          %356 = vmatprep.subr.mxu0 0.0
          %357 = vmatpush1.msra.mxu0 %v338
          %358 = vmatprep.subr.mxu0 0.0
          %359 = vmatpush1.msra.mxu0 0.0
          %360 = vmatprep.subr.mxu0 0.0
          %361 = vmatpush1.msra.mxu0 0.0
          %362 = vmatprep.subr.mxu0 0.0
          %363 = vmatpush1.msra.mxu0 0.0
          %364 = vmatprep.subr.mxu0 0.0
          %365 = vmatpush1.msra.mxu0 0.0
          %366 = vmatprep.subr.mxu0 0.0
          %367 = vmatpush1.msra.mxu0 0.0
          %368 = vmatprep.subr.mxu0 0.0
          %369 = vmatpush1.msra.mxu0 0.0
          %370 = vmatprep.subr.mxu0 0.0
          %371 = vmatpush1.msra.mxu0 0.0
          %372 = vmatprep.subr.mxu0 0.0
          %373 = vmatpush1.msra.mxu0 0.0
          %374 = vmatprep.subr.mxu0 0.0
          %375 = vmatpush1.msra.mxu0 0.0
          %376 = vmatprep.subr.mxu0 0.0
          %377 = vmatpush1.msra.mxu0 0.0
          %378 = vmatprep.subr.mxu0 0.0
          %379 = vmatpush1.msra.mxu0 0.0
          %380 = vmatprep.subr.mxu0 0.0
          %381 = vmatpush1.msra.mxu0 0.0
          %382 = vmatprep.subr.mxu0 0.0
          %383 = vmatpush1.msra.mxu0 0.0
          %384 = vmatprep.subr.mxu0 0.0
          %385 = vmatpush1.msra.mxu0 0.0
          %386 = vmatprep.subr.mxu0 0.0
          %387 = vmatpush1.msra.mxu0 0.0
          %388 = vmatprep.subr.mxu0 0.0
          %389 = vmatpush1.msra.mxu0 0.0
          %390 = vmatprep.subr.mxu0 0.0
          %391 = vmatpush1.msra.mxu0 0.0
          %392 = vmatprep.subr.mxu0 0.0
          %393 = vmatpush1.msra.mxu0 0.0
          %394 = vmatprep.subr.mxu0 0.0
          %395 = vmatpush1.msra.mxu0 0.0
          %396 = vmatprep.subr.mxu0 0.0
          %397 = vmatpush1.msra.mxu0 0.0
          %398 = vmatprep.subr.mxu0 0.0
          %399 = vmatpush1.msra.mxu0 0.0
          %400 = vmatprep.subr.mxu0 0.0
          %401 = vmatpush1.msra.mxu0 0.0
          %402 = vmatprep.subr.mxu0 0.0
          %403 = vmatpush1.msra.mxu0 0.0
          %404 = vmatprep.subr.mxu0 0.0
          %405 = vmatpush1.msra.mxu0 0.0
          %406 = vmatprep.subr.mxu0 0.0
          %407 = vmatpush1.msra.mxu0 0.0
          %408 = vmatprep.subr.mxu0 0.0
          %409 = vmatpush1.msra.mxu0 0.0
          %410 = vmatprep.subr.mxu0 0.0
          %411 = vmatpush1.msra.mxu0 0.0
          %412 = vmatprep.subr.mxu0 0.0
          %413 = vmatpush1.msra.mxu0 0.0
          %414 = vmatprep.mubr.f32.mxu0 0.0
          %415 = vmatmul.mubr.f32.gmra.mrb[0].mxu0 %v348
          %v416 = vpop.f32.mrb[0].mxu0
          %v417 = vadd.f32 %v344, %v416
          %v418 = vpop.f32.mrb[0].mxu0
          %419 = vdwg.mxu0
          %vm420 = vcmask 130048
          %421 = vst.msk [vmem:[#allocation2] sm:$0xff] %vm420, %v417
          %s422 = scalar_lea.vmem %s2, 32
          %v423 = vld [vmem:[%s422] sm:$0xff]
          %v424 = vld [vmem:[%s422 + $0x8] sm:$0xff]
          %v425 = vld [vmem:[%s422 + $0x10] sm:$0xff]
          %v426 = vld [vmem:[%s422 + $0x18] sm:$0xff]
          %s427 = scalar_lea.vmem %s4, 1
          %v428 = vld [vmem:[%s427] sm:$0x1]
          %v430 = vlaneseq
          %v431 = vshrl.u32 %v430, 7
          %v432 = vsub.s32 0, %v431
          %v433 = vrot.slane %v428, %v432
          %435 = vmatprep.subr.mxu0 0.0
          %436 = vmatpush1.msra.mxu0 %v423
          %437 = vmatprep.subr.mxu0 0.0
          %438 = vmatpush1.msra.mxu0 %v424
          %439 = vmatprep.subr.mxu0 0.0
          %440 = vmatpush1.msra.mxu0 %v425
          %441 = vmatprep.subr.mxu0 0.0
          %442 = vmatpush1.msra.mxu0 %v426
          %443 = vmatprep.subr.mxu0 0.0
          %444 = vmatpush1.msra.mxu0 0.0
          %445 = vmatprep.subr.mxu0 0.0
          %446 = vmatpush1.msra.mxu0 0.0
          %447 = vmatprep.subr.mxu0 0.0
          %448 = vmatpush1.msra.mxu0 0.0
          %449 = vmatprep.subr.mxu0 0.0
          %450 = vmatpush1.msra.mxu0 0.0
          %451 = vmatprep.subr.mxu0 0.0
          %452 = vmatpush1.msra.mxu0 0.0
          %453 = vmatprep.subr.mxu0 0.0
          %454 = vmatpush1.msra.mxu0 0.0
          %455 = vmatprep.subr.mxu0 0.0
          %456 = vmatpush1.msra.mxu0 0.0
          %457 = vmatprep.subr.mxu0 0.0
          %458 = vmatpush1.msra.mxu0 0.0
          %459 = vmatprep.subr.mxu0 0.0
          %460 = vmatpush1.msra.mxu0 0.0
          %461 = vmatprep.subr.mxu0 0.0
          %462 = vmatpush1.msra.mxu0 0.0
          %463 = vmatprep.subr.mxu0 0.0
          %464 = vmatpush1.msra.mxu0 0.0
          %465 = vmatprep.subr.mxu0 0.0
          %466 = vmatpush1.msra.mxu0 0.0
          %467 = vmatprep.subr.mxu0 0.0
          %468 = vmatpush1.msra.mxu0 0.0
          %469 = vmatprep.subr.mxu0 0.0
          %470 = vmatpush1.msra.mxu0 0.0
          %471 = vmatprep.subr.mxu0 0.0
          %472 = vmatpush1.msra.mxu0 0.0
          %473 = vmatprep.subr.mxu0 0.0
          %474 = vmatpush1.msra.mxu0 0.0
          %475 = vmatprep.subr.mxu0 0.0
          %476 = vmatpush1.msra.mxu0 0.0
          %477 = vmatprep.subr.mxu0 0.0
          %478 = vmatpush1.msra.mxu0 0.0
          %479 = vmatprep.subr.mxu0 0.0
          %480 = vmatpush1.msra.mxu0 0.0
          %481 = vmatprep.subr.mxu0 0.0
          %482 = vmatpush1.msra.mxu0 0.0
          %483 = vmatprep.subr.mxu0 0.0
          %484 = vmatpush1.msra.mxu0 0.0
          %485 = vmatprep.subr.mxu0 0.0
          %486 = vmatpush1.msra.mxu0 0.0
          %487 = vmatprep.subr.mxu0 0.0
          %488 = vmatpush1.msra.mxu0 0.0
          %489 = vmatprep.subr.mxu0 0.0
          %490 = vmatpush1.msra.mxu0 0.0
          %491 = vmatprep.subr.mxu0 0.0
          %492 = vmatpush1.msra.mxu0 0.0
          %493 = vmatprep.subr.mxu0 0.0
          %494 = vmatpush1.msra.mxu0 0.0
          %495 = vmatprep.subr.mxu0 0.0
          %496 = vmatpush1.msra.mxu0 0.0
          %497 = vmatprep.subr.mxu0 0.0
          %498 = vmatpush1.msra.mxu0 0.0
          %499 = vmatprep.mubr.f32.mxu0 0.0
          %500 = vmatmul.mubr.f32.gmra.mrb[0].mxu0 %v348
          %v501 = vpop.f32.mrb[0].mxu0
          %v502 = vadd.f32 %v433, %v501
          %v503 = vpop.f32.mrb[0].mxu0
          %504 = vdwg.mxu0
          %s505 = scalar_lea.vmem [#allocation2], 8
          %506 = vst.msk [vmem:[%s505] sm:$0xff] %vm420, %v502
          %s507 = scalar_lea.vmem %s2, 64
          %v508 = vld [vmem:[%s507] sm:$0xff]
          %v509 = vld [vmem:[%s507 + $0x8] sm:$0xff]
          %v510 = vld [vmem:[%s507 + $0x10] sm:$0xff]
          %v511 = vld [vmem:[%s507 + $0x18] sm:$0xff]
          %s512 = scalar_lea.vmem %s4, 2
          %v513 = vld [vmem:[%s512] sm:$0x1]
          %v515 = vlaneseq
          %v516 = vshrl.u32 %v515, 7
          %v517 = vsub.s32 0, %v516
          %v518 = vrot.slane %v513, %v517
          %520 = vmatprep.subr.mxu0 0.0
          %521 = vmatpush1.msra.mxu0 %v508
          %522 = vmatprep.subr.mxu0 0.0
          %523 = vmatpush1.msra.mxu0 %v509
          %524 = vmatprep.subr.mxu0 0.0
          %525 = vmatpush1.msra.mxu0 %v510
          %526 = vmatprep.subr.mxu0 0.0
          %527 = vmatpush1.msra.mxu0 %v511
          %528 = vmatprep.subr.mxu0 0.0
          %529 = vmatpush1.msra.mxu0 0.0
          %530 = vmatprep.subr.mxu0 0.0
          %531 = vmatpush1.msra.mxu0 0.0
          %532 = vmatprep.subr.mxu0 0.0
          %533 = vmatpush1.msra.mxu0 0.0
          %534 = vmatprep.subr.mxu0 0.0
          %535 = vmatpush1.msra.mxu0 0.0
          %536 = vmatprep.subr.mxu0 0.0
          %537 = vmatpush1.msra.mxu0 0.0
          %538 = vmatprep.subr.mxu0 0.0
          %539 = vmatpush1.msra.mxu0 0.0
          %540 = vmatprep.subr.mxu0 0.0
          %541 = vmatpush1.msra.mxu0 0.0
          %542 = vmatprep.subr.mxu0 0.0
          %543 = vmatpush1.msra.mxu0 0.0
          %544 = vmatprep.subr.mxu0 0.0
          %545 = vmatpush1.msra.mxu0 0.0
          %546 = vmatprep.subr.mxu0 0.0
          %547 = vmatpush1.msra.mxu0 0.0
          %548 = vmatprep.subr.mxu0 0.0
          %549 = vmatpush1.msra.mxu0 0.0
          %550 = vmatprep.subr.mxu0 0.0
          %551 = vmatpush1.msra.mxu0 0.0
          %552 = vmatprep.subr.mxu0 0.0
          %553 = vmatpush1.msra.mxu0 0.0
          %554 = vmatprep.subr.mxu0 0.0
          %555 = vmatpush1.msra.mxu0 0.0
          %556 = vmatprep.subr.mxu0 0.0
          %557 = vmatpush1.msra.mxu0 0.0
          %558 = vmatprep.subr.mxu0 0.0
          %559 = vmatpush1.msra.mxu0 0.0
          %560 = vmatprep.subr.mxu0 0.0
          %561 = vmatpush1.msra.mxu0 0.0
          %562 = vmatprep.subr.mxu0 0.0
          %563 = vmatpush1.msra.mxu0 0.0
          %564 = vmatprep.subr.mxu0 0.0
          %565 = vmatpush1.msra.mxu0 0.0
          %566 = vmatprep.subr.mxu0 0.0
          %567 = vmatpush1.msra.mxu0 0.0
          %568 = vmatprep.subr.mxu0 0.0
          %569 = vmatpush1.msra.mxu0 0.0
          %570 = vmatprep.subr.mxu0 0.0
          %571 = vmatpush1.msra.mxu0 0.0
          %572 = vmatprep.subr.mxu0 0.0
          %573 = vmatpush1.msra.mxu0 0.0
          %574 = vmatprep.subr.mxu0 0.0
          %575 = vmatpush1.msra.mxu0 0.0
          %576 = vmatprep.subr.mxu0 0.0
          %577 = vmatpush1.msra.mxu0 0.0
          %578 = vmatprep.subr.mxu0 0.0
          %579 = vmatpush1.msra.mxu0 0.0
          %580 = vmatprep.subr.mxu0 0.0
          %581 = vmatpush1.msra.mxu0 0.0
          %582 = vmatprep.subr.mxu0 0.0
          %583 = vmatpush1.msra.mxu0 0.0
          %584 = vmatprep.mubr.f32.mxu0 0.0
          %585 = vmatmul.mubr.f32.gmra.mrb[0].mxu0 %v348
          %v586 = vpop.f32.mrb[0].mxu0
          %v587 = vadd.f32 %v518, %v586
          %v588 = vpop.f32.mrb[0].mxu0
          %589 = vdwg.mxu0
          %s590 = scalar_lea.vmem [#allocation2], 16
          %591 = vst.msk [vmem:[%s590] sm:$0xff] %vm420, %v587
          %s592 = scalar_lea.vmem %s2, 96
          %v593 = vld [vmem:[%s592] sm:$0xff]
          %v594 = vld [vmem:[%s592 + $0x8] sm:$0xff]
          %v595 = vld [vmem:[%s592 + $0x10] sm:$0xff]
          %v596 = vld [vmem:[%s592 + $0x18] sm:$0xff]
          %s597 = scalar_lea.vmem %s4, 3
          %v598 = vld [vmem:[%s597] sm:$0x1]
          %v600 = vlaneseq
          %v601 = vshrl.u32 %v600, 7
          %v602 = vsub.s32 0, %v601
          %v603 = vrot.slane %v598, %v602
          %605 = vmatprep.subr.mxu0 0.0
          %606 = vmatpush1.msra.mxu0 %v593
          %607 = vmatprep.subr.mxu0 0.0
          %608 = vmatpush1.msra.mxu0 %v594
          %609 = vmatprep.subr.mxu0 0.0
          %610 = vmatpush1.msra.mxu0 %v595
          %611 = vmatprep.subr.mxu0 0.0
          %612 = vmatpush1.msra.mxu0 %v596
          %613 = vmatprep.subr.mxu0 0.0
          %614 = vmatpush1.msra.mxu0 0.0
          %615 = vmatprep.subr.mxu0 0.0
          %616 = vmatpush1.msra.mxu0 0.0
          %617 = vmatprep.subr.mxu0 0.0
          %618 = vmatpush1.msra.mxu0 0.0
          %619 = vmatprep.subr.mxu0 0.0
          %620 = vmatpush1.msra.mxu0 0.0
          %621 = vmatprep.subr.mxu0 0.0
          %622 = vmatpush1.msra.mxu0 0.0
          %623 = vmatprep.subr.mxu0 0.0
          %624 = vmatpush1.msra.mxu0 0.0
          %625 = vmatprep.subr.mxu0 0.0
          %626 = vmatpush1.msra.mxu0 0.0
          %627 = vmatprep.subr.mxu0 0.0
          %628 = vmatpush1.msra.mxu0 0.0
          %629 = vmatprep.subr.mxu0 0.0
          %630 = vmatpush1.msra.mxu0 0.0
          %631 = vmatprep.subr.mxu0 0.0
          %632 = vmatpush1.msra.mxu0 0.0
          %633 = vmatprep.subr.mxu0 0.0
          %634 = vmatpush1.msra.mxu0 0.0
          %635 = vmatprep.subr.mxu0 0.0
          %636 = vmatpush1.msra.mxu0 0.0
          %637 = vmatprep.subr.mxu0 0.0
          %638 = vmatpush1.msra.mxu0 0.0
          %639 = vmatprep.subr.mxu0 0.0
          %640 = vmatpush1.msra.mxu0 0.0
          %641 = vmatprep.subr.mxu0 0.0
          %642 = vmatpush1.msra.mxu0 0.0
          %643 = vmatprep.subr.mxu0 0.0
          %644 = vmatpush1.msra.mxu0 0.0
          %645 = vmatprep.subr.mxu0 0.0
          %646 = vmatpush1.msra.mxu0 0.0
          %647 = vmatprep.subr.mxu0 0.0
          %648 = vmatpush1.msra.mxu0 0.0
          %649 = vmatprep.subr.mxu0 0.0
          %650 = vmatpush1.msra.mxu0 0.0
          %651 = vmatprep.subr.mxu0 0.0
          %652 = vmatpush1.msra.mxu0 0.0
          %653 = vmatprep.subr.mxu0 0.0
          %654 = vmatpush1.msra.mxu0 0.0
          %655 = vmatprep.subr.mxu0 0.0
          %656 = vmatpush1.msra.mxu0 0.0
          %657 = vmatprep.subr.mxu0 0.0
          %658 = vmatpush1.msra.mxu0 0.0
          %659 = vmatprep.subr.mxu0 0.0
          %660 = vmatpush1.msra.mxu0 0.0
          %661 = vmatprep.subr.mxu0 0.0
          %662 = vmatpush1.msra.mxu0 0.0
          %663 = vmatprep.subr.mxu0 0.0
          %664 = vmatpush1.msra.mxu0 0.0
          %665 = vmatprep.subr.mxu0 0.0
          %666 = vmatpush1.msra.mxu0 0.0
          %667 = vmatprep.subr.mxu0 0.0
          %668 = vmatpush1.msra.mxu0 0.0
          %669 = vmatprep.mubr.f32.mxu0 0.0
          %670 = vmatmul.mubr.f32.gmra.mrb[0].mxu0 %v348
          %v671 = vpop.f32.mrb[0].mxu0
          %v672 = vadd.f32 %v603, %v671
          %v673 = vpop.f32.mrb[0].mxu0
          %674 = vdwg.mxu0
          %s675 = scalar_lea.vmem [#allocation2], 24
          %676 = vst.msk [vmem:[%s675] sm:$0xff] %vm420, %v672
        $region52: #{tpu_custom_call.1} parent=47 // pred_fallthru
          _
        %s677 = smul.u32 %s26, 8
        %s678 = scalar_lea.vmem %s319, %s677
        %v679 = vld [vmem:[%s678] sm:$0xff]
        %v680 = vld [vmem:[%s326] sm:$0xff]
        %v681 = vld [vmem:[%s329] sm:$0x1]
        %683 = vset.pattern.permute.xlu0 0
        %684 = vperm.xlu0 %683, %v680
        %v685 = vpop.permute.xlu0 %684
        %v688 = vlaneseq
        %v689 = vshrl.u32 %v688, 7
        %v690 = vsub.s32 0, %v689
        %v691 = vrot.slane %v681, %v690
        %v693 = vadd.f32 %v685, %v691
        %v694 = vlaneseq
        %v695 = vshrl.u32 %v694, 7
        %v696 = vstv %s677
        %v697 = vadd.s32 %v695, %v696
        %v698 = vlaneseq
        %v699 = vand.u32 %v698, 127
        %vm700 = vcmp.gt.s32.totalorder %v697, %v699
        %v701 = vsel %vm700, -2.5e+11, 0.0
        %v702 = vadd.f32 %v693, %v701
        %v703 = vld [vmem:[%s1] sm:$0xff]
        %v704 = vld [vmem:[%s1 + $0x8] sm:$0xff]
        %v705 = vld [vmem:[%s1 + $0x10] sm:$0xff]
        %v706 = vld [vmem:[%s1 + $0x18] sm:$0xff]
        %v707 = vld [vmem:[%s3] sm:$0x1]
        %v709 = vlaneseq
        %v710 = vshrl.u32 %v709, 7
        %v711 = vsub.s32 0, %v710
        %v712 = vrot.slane %v707, %v711
        %vm714 = vcmask 261120
        %v716 = vsel %vm714, %v679, 0
        %718 = vmatprep.subr.mxu0 0.0
        %719 = vmatpush1.msra.mxu0 %v703
        %720 = vmatprep.subr.mxu0 0.0
        %721 = vmatpush1.msra.mxu0 %v704
        %722 = vmatprep.subr.mxu0 0.0
        %723 = vmatpush1.msra.mxu0 %v705
        %724 = vmatprep.subr.mxu0 0.0
        %725 = vmatpush1.msra.mxu0 %v706
        %726 = vmatprep.subr.mxu0 0.0
        %727 = vmatpush1.msra.mxu0 0.0
        %728 = vmatprep.subr.mxu0 0.0
        %729 = vmatpush1.msra.mxu0 0.0
        %730 = vmatprep.subr.mxu0 0.0
        %731 = vmatpush1.msra.mxu0 0.0
        %732 = vmatprep.subr.mxu0 0.0
        %733 = vmatpush1.msra.mxu0 0.0
        %734 = vmatprep.subr.mxu0 0.0
        %735 = vmatpush1.msra.mxu0 0.0
        %736 = vmatprep.subr.mxu0 0.0
        %737 = vmatpush1.msra.mxu0 0.0
        %738 = vmatprep.subr.mxu0 0.0
        %739 = vmatpush1.msra.mxu0 0.0
        %740 = vmatprep.subr.mxu0 0.0
        %741 = vmatpush1.msra.mxu0 0.0
        %742 = vmatprep.subr.mxu0 0.0
        %743 = vmatpush1.msra.mxu0 0.0
        %744 = vmatprep.subr.mxu0 0.0
        %745 = vmatpush1.msra.mxu0 0.0
        %746 = vmatprep.subr.mxu0 0.0
        %747 = vmatpush1.msra.mxu0 0.0
        %748 = vmatprep.subr.mxu0 0.0
        %749 = vmatpush1.msra.mxu0 0.0
        %750 = vmatprep.subr.mxu0 0.0
        %751 = vmatpush1.msra.mxu0 0.0
        %752 = vmatprep.subr.mxu0 0.0
        %753 = vmatpush1.msra.mxu0 0.0
        %754 = vmatprep.subr.mxu0 0.0
        %755 = vmatpush1.msra.mxu0 0.0
        %756 = vmatprep.subr.mxu0 0.0
        %757 = vmatpush1.msra.mxu0 0.0
        %758 = vmatprep.subr.mxu0 0.0
        %759 = vmatpush1.msra.mxu0 0.0
        %760 = vmatprep.subr.mxu0 0.0
        %761 = vmatpush1.msra.mxu0 0.0
        %762 = vmatprep.subr.mxu0 0.0
        %763 = vmatpush1.msra.mxu0 0.0
        %764 = vmatprep.subr.mxu0 0.0
        %765 = vmatpush1.msra.mxu0 0.0
        %766 = vmatprep.subr.mxu0 0.0
        %767 = vmatpush1.msra.mxu0 0.0
        %768 = vmatprep.subr.mxu0 0.0
        %769 = vmatpush1.msra.mxu0 0.0
        %770 = vmatprep.subr.mxu0 0.0
        %771 = vmatpush1.msra.mxu0 0.0
        %772 = vmatprep.subr.mxu0 0.0
        %773 = vmatpush1.msra.mxu0 0.0
        %774 = vmatprep.subr.mxu0 0.0
        %775 = vmatpush1.msra.mxu0 0.0
        %776 = vmatprep.subr.mxu0 0.0
        %777 = vmatpush1.msra.mxu0 0.0
        %778 = vmatprep.subr.mxu0 0.0
        %779 = vmatpush1.msra.mxu0 0.0
        %780 = vmatprep.subr.mxu0 0.0
        %781 = vmatpush1.msra.mxu0 0.0
        %782 = vmatprep.mubr.f32.mxu0 0.0
        %783 = vmatmul.mubr.f32.gmra.mrb[0].mxu0 %v716
        %v784 = vpop.f32.mrb[0].mxu0
        %v785 = vadd.f32 %v712, %v784
        %v786 = vpop.f32.mrb[0].mxu0
        %787 = vdwg.mxu0
        %v788 = vld [vmem:[#allocation2] sm:$0xff]
        %vm789 = vcmask 130048
        %v791 = vsel %vm789, %v785, 0
        %v794 = vsel %vm789, %v788, 0
        %796 = vmatprep.subr.mxu0 0.0
        %797 = vmatpush1.xpose.msra.mxu0 %v794
        %798 = vmatprep.subr.mxu0 0.0
        %799 = vmatpush1.xpose.msra.mxu0 0.0
        %800 = vmatprep.subr.mxu0 0.0
        %801 = vmatpush1.xpose.msra.mxu0 0.0
        %802 = vmatprep.subr.mxu0 0.0
        %803 = vmatpush1.xpose.msra.mxu0 0.0
        %804 = vmatprep.subr.mxu0 0.0
        %805 = vmatpush1.xpose.msra.mxu0 0.0
        %806 = vmatprep.subr.mxu0 0.0
        %807 = vmatpush1.xpose.msra.mxu0 0.0
        %808 = vmatprep.subr.mxu0 0.0
        %809 = vmatpush1.xpose.msra.mxu0 0.0
        %810 = vmatprep.subr.mxu0 0.0
        %811 = vmatpush1.xpose.msra.mxu0 0.0
        %812 = vmatprep.subr.mxu0 0.0
        %813 = vmatpush1.xpose.msra.mxu0 0.0
        %814 = vmatprep.subr.mxu0 0.0
        %815 = vmatpush1.xpose.msra.mxu0 0.0
        %816 = vmatprep.subr.mxu0 0.0
        %817 = vmatpush1.xpose.msra.mxu0 0.0
        %818 = vmatprep.subr.mxu0 0.0
        %819 = vmatpush1.xpose.msra.mxu0 0.0
        %820 = vmatprep.subr.mxu0 0.0
        %821 = vmatpush1.xpose.msra.mxu0 0.0
        %822 = vmatprep.subr.mxu0 0.0
        %823 = vmatpush1.xpose.msra.mxu0 0.0
        %824 = vmatprep.subr.mxu0 0.0
        %825 = vmatpush1.xpose.msra.mxu0 0.0
        %826 = vmatprep.subr.mxu0 0.0
        %827 = vmatpush1.xpose.msra.mxu0 0.0
        %828 = vmatprep.subr.mxu0 0.0
        %829 = vmatpush1.xpose.msra.mxu0 0.0
        %830 = vmatprep.subr.mxu0 0.0
        %831 = vmatpush1.xpose.msra.mxu0 0.0
        %832 = vmatprep.subr.mxu0 0.0
        %833 = vmatpush1.xpose.msra.mxu0 0.0
        %834 = vmatprep.subr.mxu0 0.0
        %835 = vmatpush1.xpose.msra.mxu0 0.0
        %836 = vmatprep.subr.mxu0 0.0
        %837 = vmatpush1.xpose.msra.mxu0 0.0
        %838 = vmatprep.subr.mxu0 0.0
        %839 = vmatpush1.xpose.msra.mxu0 0.0
        %840 = vmatprep.subr.mxu0 0.0
        %841 = vmatpush1.xpose.msra.mxu0 0.0
        %842 = vmatprep.subr.mxu0 0.0
        %843 = vmatpush1.xpose.msra.mxu0 0.0
        %844 = vmatprep.subr.mxu0 0.0
        %845 = vmatpush1.xpose.msra.mxu0 0.0
        %846 = vmatprep.subr.mxu0 0.0
        %847 = vmatpush1.xpose.msra.mxu0 0.0
        %848 = vmatprep.subr.mxu0 0.0
        %849 = vmatpush1.xpose.msra.mxu0 0.0
        %850 = vmatprep.subr.mxu0 0.0
        %851 = vmatpush1.xpose.msra.mxu0 0.0
        %852 = vmatprep.subr.mxu0 0.0
        %853 = vmatpush1.xpose.msra.mxu0 0.0
        %854 = vmatprep.subr.mxu0 0.0
        %855 = vmatpush1.xpose.msra.mxu0 0.0
        %856 = vmatprep.subr.mxu0 0.0
        %857 = vmatpush1.xpose.msra.mxu0 0.0
        %858 = vmatprep.subr.mxu0 0.0
        %859 = vmatpush1.xpose.msra.mxu0 0.0
        %860 = vmatprep.mubr.f32.mxu0 0.0
        %861 = vmatmul.mubr.f32.gmra.mrb[0].mxu0 %v791
        %v862 = vpop.f32.mrb[0].mxu0
        %v863 = vadd.f32 %v702, %v862
        %v864 = vpop.f32.mrb[0].mxu0
        %865 = vdwg.mxu0
        %vm866 = vcmask 64512
        %867 = vst.msk [vmem:[%s315] sm:$0xff] %vm866, %v863
        %s868 = scalar_lea.vmem %s1, 32
        %v869 = vld [vmem:[%s868] sm:$0xff]
        %v870 = vld [vmem:[%s868 + $0x8] sm:$0xff]
        %v871 = vld [vmem:[%s868 + $0x10] sm:$0xff]
        %v872 = vld [vmem:[%s868 + $0x18] sm:$0xff]
        %s873 = scalar_lea.vmem %s3, 1
        %v874 = vld [vmem:[%s873] sm:$0x1]
        %v876 = vlaneseq
        %v877 = vshrl.u32 %v876, 7
        %v878 = vsub.s32 0, %v877
        %v879 = vrot.slane %v874, %v878
        %881 = vmatprep.subr.mxu0 0.0
        %882 = vmatpush1.msra.mxu0 %v869
        %883 = vmatprep.subr.mxu0 0.0
        %884 = vmatpush1.msra.mxu0 %v870
        %885 = vmatprep.subr.mxu0 0.0
        %886 = vmatpush1.msra.mxu0 %v871
        %887 = vmatprep.subr.mxu0 0.0
        %888 = vmatpush1.msra.mxu0 %v872
        %889 = vmatprep.subr.mxu0 0.0
        %890 = vmatpush1.msra.mxu0 0.0
        %891 = vmatprep.subr.mxu0 0.0
        %892 = vmatpush1.msra.mxu0 0.0
        %893 = vmatprep.subr.mxu0 0.0
        %894 = vmatpush1.msra.mxu0 0.0
        %895 = vmatprep.subr.mxu0 0.0
        %896 = vmatpush1.msra.mxu0 0.0
        %897 = vmatprep.subr.mxu0 0.0
        %898 = vmatpush1.msra.mxu0 0.0
        %899 = vmatprep.subr.mxu0 0.0
        %900 = vmatpush1.msra.mxu0 0.0
        %901 = vmatprep.subr.mxu0 0.0
        %902 = vmatpush1.msra.mxu0 0.0
        %903 = vmatprep.subr.mxu0 0.0
        %904 = vmatpush1.msra.mxu0 0.0
        %905 = vmatprep.subr.mxu0 0.0
        %906 = vmatpush1.msra.mxu0 0.0
        %907 = vmatprep.subr.mxu0 0.0
        %908 = vmatpush1.msra.mxu0 0.0
        %909 = vmatprep.subr.mxu0 0.0
        %910 = vmatpush1.msra.mxu0 0.0
        %911 = vmatprep.subr.mxu0 0.0
        %912 = vmatpush1.msra.mxu0 0.0
        %913 = vmatprep.subr.mxu0 0.0
        %914 = vmatpush1.msra.mxu0 0.0
        %915 = vmatprep.subr.mxu0 0.0
        %916 = vmatpush1.msra.mxu0 0.0
        %917 = vmatprep.subr.mxu0 0.0
        %918 = vmatpush1.msra.mxu0 0.0
        %919 = vmatprep.subr.mxu0 0.0
        %920 = vmatpush1.msra.mxu0 0.0
        %921 = vmatprep.subr.mxu0 0.0
        %922 = vmatpush1.msra.mxu0 0.0
        %923 = vmatprep.subr.mxu0 0.0
        %924 = vmatpush1.msra.mxu0 0.0
        %925 = vmatprep.subr.mxu0 0.0
        %926 = vmatpush1.msra.mxu0 0.0
        %927 = vmatprep.subr.mxu0 0.0
        %928 = vmatpush1.msra.mxu0 0.0
        %929 = vmatprep.subr.mxu0 0.0
        %930 = vmatpush1.msra.mxu0 0.0
        %931 = vmatprep.subr.mxu0 0.0
        %932 = vmatpush1.msra.mxu0 0.0
        %933 = vmatprep.subr.mxu0 0.0
        %934 = vmatpush1.msra.mxu0 0.0
        %935 = vmatprep.subr.mxu0 0.0
        %936 = vmatpush1.msra.mxu0 0.0
        %937 = vmatprep.subr.mxu0 0.0
        %938 = vmatpush1.msra.mxu0 0.0
        %939 = vmatprep.subr.mxu0 0.0
        %940 = vmatpush1.msra.mxu0 0.0
        %941 = vmatprep.subr.mxu0 0.0
        %942 = vmatpush1.msra.mxu0 0.0
        %943 = vmatprep.subr.mxu0 0.0
        %944 = vmatpush1.msra.mxu0 0.0
        %945 = vmatprep.mubr.f32.mxu0 0.0
        %946 = vmatmul.mubr.f32.gmra.mrb[0].mxu0 %v716
        %v947 = vpop.f32.mrb[0].mxu0
        %v948 = vadd.f32 %v879, %v947
        %v949 = vpop.f32.mrb[0].mxu0
        %950 = vdwg.mxu0
        %s951 = scalar_lea.vmem [#allocation2], 8
        %v952 = vld [vmem:[%s951] sm:$0xff]
        %v954 = vsel %vm789, %v948, 0
        %v957 = vsel %vm789, %v952, 0
        %959 = vmatprep.subr.mxu0 0.0
        %960 = vmatpush1.xpose.msra.mxu0 %v957
        %961 = vmatprep.subr.mxu0 0.0
        %962 = vmatpush1.xpose.msra.mxu0 0.0
        %963 = vmatprep.subr.mxu0 0.0
        %964 = vmatpush1.xpose.msra.mxu0 0.0
        %965 = vmatprep.subr.mxu0 0.0
        %966 = vmatpush1.xpose.msra.mxu0 0.0
        %967 = vmatprep.subr.mxu0 0.0
        %968 = vmatpush1.xpose.msra.mxu0 0.0
        %969 = vmatprep.subr.mxu0 0.0
        %970 = vmatpush1.xpose.msra.mxu0 0.0
        %971 = vmatprep.subr.mxu0 0.0
        %972 = vmatpush1.xpose.msra.mxu0 0.0
        %973 = vmatprep.subr.mxu0 0.0
        %974 = vmatpush1.xpose.msra.mxu0 0.0
        %975 = vmatprep.subr.mxu0 0.0
        %976 = vmatpush1.xpose.msra.mxu0 0.0
        %977 = vmatprep.subr.mxu0 0.0
        %978 = vmatpush1.xpose.msra.mxu0 0.0
        %979 = vmatprep.subr.mxu0 0.0
        %980 = vmatpush1.xpose.msra.mxu0 0.0
        %981 = vmatprep.subr.mxu0 0.0
        %982 = vmatpush1.xpose.msra.mxu0 0.0
        %983 = vmatprep.subr.mxu0 0.0
        %984 = vmatpush1.xpose.msra.mxu0 0.0
        %985 = vmatprep.subr.mxu0 0.0
        %986 = vmatpush1.xpose.msra.mxu0 0.0
        %987 = vmatprep.subr.mxu0 0.0
        %988 = vmatpush1.xpose.msra.mxu0 0.0
        %989 = vmatprep.subr.mxu0 0.0
        %990 = vmatpush1.xpose.msra.mxu0 0.0
        %991 = vmatprep.subr.mxu0 0.0
        %992 = vmatpush1.xpose.msra.mxu0 0.0
        %993 = vmatprep.subr.mxu0 0.0
        %994 = vmatpush1.xpose.msra.mxu0 0.0
        %995 = vmatprep.subr.mxu0 0.0
        %996 = vmatpush1.xpose.msra.mxu0 0.0
        %997 = vmatprep.subr.mxu0 0.0
        %998 = vmatpush1.xpose.msra.mxu0 0.0
        %999 = vmatprep.subr.mxu0 0.0
        %1000 = vmatpush1.xpose.msra.mxu0 0.0
        %1001 = vmatprep.subr.mxu0 0.0
        %1002 = vmatpush1.xpose.msra.mxu0 0.0
        %1003 = vmatprep.subr.mxu0 0.0
        %1004 = vmatpush1.xpose.msra.mxu0 0.0
        %1005 = vmatprep.subr.mxu0 0.0
        %1006 = vmatpush1.xpose.msra.mxu0 0.0
        %1007 = vmatprep.subr.mxu0 0.0
        %1008 = vmatpush1.xpose.msra.mxu0 0.0
        %1009 = vmatprep.subr.mxu0 0.0
        %1010 = vmatpush1.xpose.msra.mxu0 0.0
        %1011 = vmatprep.subr.mxu0 0.0
        %1012 = vmatpush1.xpose.msra.mxu0 0.0
        %1013 = vmatprep.subr.mxu0 0.0
        %1014 = vmatpush1.xpose.msra.mxu0 0.0
        %1015 = vmatprep.subr.mxu0 0.0
        %1016 = vmatpush1.xpose.msra.mxu0 0.0
        %1017 = vmatprep.subr.mxu0 0.0
        %1018 = vmatpush1.xpose.msra.mxu0 0.0
        %1019 = vmatprep.subr.mxu0 0.0
        %1020 = vmatpush1.xpose.msra.mxu0 0.0
        %1021 = vmatprep.subr.mxu0 0.0
        %1022 = vmatpush1.xpose.msra.mxu0 0.0
        %1023 = vmatprep.mubr.f32.mxu0 0.0
        %1024 = vmatmul.mubr.f32.gmra.mrb[0].mxu0 %v954
        %v1025 = vpop.f32.mrb[0].mxu0
        %v1026 = vadd.f32 %v702, %v1025
        %v1027 = vpop.f32.mrb[0].mxu0
        %1028 = vdwg.mxu0
        %s1029 = scalar_lea.vmem %s315, 8 [#allocation3]
        %1030 = vst.msk [vmem:[%s1029] sm:$0xff] %vm866, %v1026
        %s1031 = scalar_lea.vmem %s1, 64
        %v1032 = vld [vmem:[%s1031] sm:$0xff]
        %v1033 = vld [vmem:[%s1031 + $0x8] sm:$0xff]
        %v1034 = vld [vmem:[%s1031 + $0x10] sm:$0xff]
        %v1035 = vld [vmem:[%s1031 + $0x18] sm:$0xff]
        %s1036 = scalar_lea.vmem %s3, 2
        %v1037 = vld [vmem:[%s1036] sm:$0x1]
        %v1039 = vlaneseq
        %v1040 = vshrl.u32 %v1039, 7
        %v1041 = vsub.s32 0, %v1040
        %v1042 = vrot.slane %v1037, %v1041
        %1044 = vmatprep.subr.mxu0 0.0
        %1045 = vmatpush1.msra.mxu0 %v1032
        %1046 = vmatprep.subr.mxu0 0.0
        %1047 = vmatpush1.msra.mxu0 %v1033
        %1048 = vmatprep.subr.mxu0 0.0
        %1049 = vmatpush1.msra.mxu0 %v1034
        %1050 = vmatprep.subr.mxu0 0.0
        %1051 = vmatpush1.msra.mxu0 %v1035
        %1052 = vmatprep.subr.mxu0 0.0
        %1053 = vmatpush1.msra.mxu0 0.0
        %1054 = vmatprep.subr.mxu0 0.0
        %1055 = vmatpush1.msra.mxu0 0.0
        %1056 = vmatprep.subr.mxu0 0.0
        %1057 = vmatpush1.msra.mxu0 0.0
        %1058 = vmatprep.subr.mxu0 0.0
        %1059 = vmatpush1.msra.mxu0 0.0
        %1060 = vmatprep.subr.mxu0 0.0
        %1061 = vmatpush1.msra.mxu0 0.0
        %1062 = vmatprep.subr.mxu0 0.0
        %1063 = vmatpush1.msra.mxu0 0.0
        %1064 = vmatprep.subr.mxu0 0.0
        %1065 = vmatpush1.msra.mxu0 0.0
        %1066 = vmatprep.subr.mxu0 0.0
        %1067 = vmatpush1.msra.mxu0 0.0
        %1068 = vmatprep.subr.mxu0 0.0
        %1069 = vmatpush1.msra.mxu0 0.0
        %1070 = vmatprep.subr.mxu0 0.0
        %1071 = vmatpush1.msra.mxu0 0.0
        %1072 = vmatprep.subr.mxu0 0.0
        %1073 = vmatpush1.msra.mxu0 0.0
        %1074 = vmatprep.subr.mxu0 0.0
        %1075 = vmatpush1.msra.mxu0 0.0
        %1076 = vmatprep.subr.mxu0 0.0
        %1077 = vmatpush1.msra.mxu0 0.0
        %1078 = vmatprep.subr.mxu0 0.0
        %1079 = vmatpush1.msra.mxu0 0.0
        %1080 = vmatprep.subr.mxu0 0.0
        %1081 = vmatpush1.msra.mxu0 0.0
        %1082 = vmatprep.subr.mxu0 0.0
        %1083 = vmatpush1.msra.mxu0 0.0
        %1084 = vmatprep.subr.mxu0 0.0
        %1085 = vmatpush1.msra.mxu0 0.0
        %1086 = vmatprep.subr.mxu0 0.0
        %1087 = vmatpush1.msra.mxu0 0.0
        %1088 = vmatprep.subr.mxu0 0.0
        %1089 = vmatpush1.msra.mxu0 0.0
        %1090 = vmatprep.subr.mxu0 0.0
        %1091 = vmatpush1.msra.mxu0 0.0
        %1092 = vmatprep.subr.mxu0 0.0
        %1093 = vmatpush1.msra.mxu0 0.0
        %1094 = vmatprep.subr.mxu0 0.0
        %1095 = vmatpush1.msra.mxu0 0.0
        %1096 = vmatprep.subr.mxu0 0.0
        %1097 = vmatpush1.msra.mxu0 0.0
        %1098 = vmatprep.subr.mxu0 0.0
        %1099 = vmatpush1.msra.mxu0 0.0
        %1100 = vmatprep.subr.mxu0 0.0
        %1101 = vmatpush1.msra.mxu0 0.0
        %1102 = vmatprep.subr.mxu0 0.0
        %1103 = vmatpush1.msra.mxu0 0.0
        %1104 = vmatprep.subr.mxu0 0.0
        %1105 = vmatpush1.msra.mxu0 0.0
        %1106 = vmatprep.subr.mxu0 0.0
        %1107 = vmatpush1.msra.mxu0 0.0
        %1108 = vmatprep.mubr.f32.mxu0 0.0
        %1109 = vmatmul.mubr.f32.gmra.mrb[0].mxu0 %v716
        %v1110 = vpop.f32.mrb[0].mxu0
        %v1111 = vadd.f32 %v1042, %v1110
        %v1112 = vpop.f32.mrb[0].mxu0
        %1113 = vdwg.mxu0
        %s1114 = scalar_lea.vmem [#allocation2], 16
        %v1115 = vld [vmem:[%s1114] sm:$0xff]
        %v1117 = vsel %vm789, %v1111, 0
        %v1120 = vsel %vm789, %v1115, 0
        %1122 = vmatprep.subr.mxu0 0.0
        %1123 = vmatpush1.xpose.msra.mxu0 %v1120
        %1124 = vmatprep.subr.mxu0 0.0
        %1125 = vmatpush1.xpose.msra.mxu0 0.0
        %1126 = vmatprep.subr.mxu0 0.0
        %1127 = vmatpush1.xpose.msra.mxu0 0.0
        %1128 = vmatprep.subr.mxu0 0.0
        %1129 = vmatpush1.xpose.msra.mxu0 0.0
        %1130 = vmatprep.subr.mxu0 0.0
        %1131 = vmatpush1.xpose.msra.mxu0 0.0
        %1132 = vmatprep.subr.mxu0 0.0
        %1133 = vmatpush1.xpose.msra.mxu0 0.0
        %1134 = vmatprep.subr.mxu0 0.0
        %1135 = vmatpush1.xpose.msra.mxu0 0.0
        %1136 = vmatprep.subr.mxu0 0.0
        %1137 = vmatpush1.xpose.msra.mxu0 0.0
        %1138 = vmatprep.subr.mxu0 0.0
        %1139 = vmatpush1.xpose.msra.mxu0 0.0
        %1140 = vmatprep.subr.mxu0 0.0
        %1141 = vmatpush1.xpose.msra.mxu0 0.0
        %1142 = vmatprep.subr.mxu0 0.0
        %1143 = vmatpush1.xpose.msra.mxu0 0.0
        %1144 = vmatprep.subr.mxu0 0.0
        %1145 = vmatpush1.xpose.msra.mxu0 0.0
        %1146 = vmatprep.subr.mxu0 0.0
        %1147 = vmatpush1.xpose.msra.mxu0 0.0
        %1148 = vmatprep.subr.mxu0 0.0
        %1149 = vmatpush1.xpose.msra.mxu0 0.0
        %1150 = vmatprep.subr.mxu0 0.0
        %1151 = vmatpush1.xpose.msra.mxu0 0.0
        %1152 = vmatprep.subr.mxu0 0.0
        %1153 = vmatpush1.xpose.msra.mxu0 0.0
        %1154 = vmatprep.subr.mxu0 0.0
        %1155 = vmatpush1.xpose.msra.mxu0 0.0
        %1156 = vmatprep.subr.mxu0 0.0
        %1157 = vmatpush1.xpose.msra.mxu0 0.0
        %1158 = vmatprep.subr.mxu0 0.0
        %1159 = vmatpush1.xpose.msra.mxu0 0.0
        %1160 = vmatprep.subr.mxu0 0.0
        %1161 = vmatpush1.xpose.msra.mxu0 0.0
        %1162 = vmatprep.subr.mxu0 0.0
        %1163 = vmatpush1.xpose.msra.mxu0 0.0
        %1164 = vmatprep.subr.mxu0 0.0
        %1165 = vmatpush1.xpose.msra.mxu0 0.0
        %1166 = vmatprep.subr.mxu0 0.0
        %1167 = vmatpush1.xpose.msra.mxu0 0.0
        %1168 = vmatprep.subr.mxu0 0.0
        %1169 = vmatpush1.xpose.msra.mxu0 0.0
        %1170 = vmatprep.subr.mxu0 0.0
        %1171 = vmatpush1.xpose.msra.mxu0 0.0
        %1172 = vmatprep.subr.mxu0 0.0
        %1173 = vmatpush1.xpose.msra.mxu0 0.0
        %1174 = vmatprep.subr.mxu0 0.0
        %1175 = vmatpush1.xpose.msra.mxu0 0.0
        %1176 = vmatprep.subr.mxu0 0.0
        %1177 = vmatpush1.xpose.msra.mxu0 0.0
        %1178 = vmatprep.subr.mxu0 0.0
        %1179 = vmatpush1.xpose.msra.mxu0 0.0
        %1180 = vmatprep.subr.mxu0 0.0
        %1181 = vmatpush1.xpose.msra.mxu0 0.0
        %1182 = vmatprep.subr.mxu0 0.0
        %1183 = vmatpush1.xpose.msra.mxu0 0.0
        %1184 = vmatprep.subr.mxu0 0.0
        %1185 = vmatpush1.xpose.msra.mxu0 0.0
        %1186 = vmatprep.mubr.f32.mxu0 0.0
        %1187 = vmatmul.mubr.f32.gmra.mrb[0].mxu0 %v1117
        %v1188 = vpop.f32.mrb[0].mxu0
        %v1189 = vadd.f32 %v702, %v1188
        %v1190 = vpop.f32.mrb[0].mxu0
        %1191 = vdwg.mxu0
        %s1192 = scalar_lea.vmem %s315, 16 [#allocation3]
        %1193 = vst.msk [vmem:[%s1192] sm:$0xff] %vm866, %v1189
        %s1194 = scalar_lea.vmem %s1, 96
        %v1195 = vld [vmem:[%s1194] sm:$0xff]
        %v1196 = vld [vmem:[%s1194 + $0x8] sm:$0xff]
        %v1197 = vld [vmem:[%s1194 + $0x10] sm:$0xff]
        %v1198 = vld [vmem:[%s1194 + $0x18] sm:$0xff]
        %s1199 = scalar_lea.vmem %s3, 3
        %v1200 = vld [vmem:[%s1199] sm:$0x1]
        %v1202 = vlaneseq
        %v1203 = vshrl.u32 %v1202, 7
        %v1204 = vsub.s32 0, %v1203
        %v1205 = vrot.slane %v1200, %v1204
        %1207 = vmatprep.subr.mxu0 0.0
        %1208 = vmatpush1.msra.mxu0 %v1195
        %1209 = vmatprep.subr.mxu0 0.0
        %1210 = vmatpush1.msra.mxu0 %v1196
        %1211 = vmatprep.subr.mxu0 0.0
        %1212 = vmatpush1.msra.mxu0 %v1197
        %1213 = vmatprep.subr.mxu0 0.0
        %1214 = vmatpush1.msra.mxu0 %v1198
        %1215 = vmatprep.subr.mxu0 0.0
        %1216 = vmatpush1.msra.mxu0 0.0
        %1217 = vmatprep.subr.mxu0 0.0
        %1218 = vmatpush1.msra.mxu0 0.0
        %1219 = vmatprep.subr.mxu0 0.0
        %1220 = vmatpush1.msra.mxu0 0.0
        %1221 = vmatprep.subr.mxu0 0.0
        %1222 = vmatpush1.msra.mxu0 0.0
        %1223 = vmatprep.subr.mxu0 0.0
        %1224 = vmatpush1.msra.mxu0 0.0
        %1225 = vmatprep.subr.mxu0 0.0
        %1226 = vmatpush1.msra.mxu0 0.0
        %1227 = vmatprep.subr.mxu0 0.0
        %1228 = vmatpush1.msra.mxu0 0.0
        %1229 = vmatprep.subr.mxu0 0.0
        %1230 = vmatpush1.msra.mxu0 0.0
        %1231 = vmatprep.subr.mxu0 0.0
        %1232 = vmatpush1.msra.mxu0 0.0
        %1233 = vmatprep.subr.mxu0 0.0
        %1234 = vmatpush1.msra.mxu0 0.0
        %1235 = vmatprep.subr.mxu0 0.0
        %1236 = vmatpush1.msra.mxu0 0.0
        %1237 = vmatprep.subr.mxu0 0.0
        %1238 = vmatpush1.msra.mxu0 0.0
        %1239 = vmatprep.subr.mxu0 0.0
        %1240 = vmatpush1.msra.mxu0 0.0
        %1241 = vmatprep.subr.mxu0 0.0
        %1242 = vmatpush1.msra.mxu0 0.0
        %1243 = vmatprep.subr.mxu0 0.0
        %1244 = vmatpush1.msra.mxu0 0.0
        %1245 = vmatprep.subr.mxu0 0.0
        %1246 = vmatpush1.msra.mxu0 0.0
        %1247 = vmatprep.subr.mxu0 0.0
        %1248 = vmatpush1.msra.mxu0 0.0
        %1249 = vmatprep.subr.mxu0 0.0
        %1250 = vmatpush1.msra.mxu0 0.0
        %1251 = vmatprep.subr.mxu0 0.0
        %1252 = vmatpush1.msra.mxu0 0.0
        %1253 = vmatprep.subr.mxu0 0.0
        %1254 = vmatpush1.msra.mxu0 0.0
        %1255 = vmatprep.subr.mxu0 0.0
        %1256 = vmatpush1.msra.mxu0 0.0
        %1257 = vmatprep.subr.mxu0 0.0
        %1258 = vmatpush1.msra.mxu0 0.0
        %1259 = vmatprep.subr.mxu0 0.0
        %1260 = vmatpush1.msra.mxu0 0.0
        %1261 = vmatprep.subr.mxu0 0.0
        %1262 = vmatpush1.msra.mxu0 0.0
        %1263 = vmatprep.subr.mxu0 0.0
        %1264 = vmatpush1.msra.mxu0 0.0
        %1265 = vmatprep.subr.mxu0 0.0
        %1266 = vmatpush1.msra.mxu0 0.0
        %1267 = vmatprep.subr.mxu0 0.0
        %1268 = vmatpush1.msra.mxu0 0.0
        %1269 = vmatprep.subr.mxu0 0.0
        %1270 = vmatpush1.msra.mxu0 0.0
        %1271 = vmatprep.mubr.f32.mxu0 0.0
        %1272 = vmatmul.mubr.f32.gmra.mrb[0].mxu0 %v716
        %v1273 = vpop.f32.mrb[0].mxu0
        %v1274 = vadd.f32 %v1205, %v1273
        %v1275 = vpop.f32.mrb[0].mxu0
        %1276 = vdwg.mxu0
        %s1277 = scalar_lea.vmem [#allocation2], 24
        %v1278 = vld [vmem:[%s1277] sm:$0xff]
        %v1280 = vsel %vm789, %v1274, 0
        %v1283 = vsel %vm789, %v1278, 0
        %1285 = vmatprep.subr.mxu0 0.0
        %1286 = vmatpush1.xpose.msra.mxu0 %v1283
        %1287 = vmatprep.subr.mxu0 0.0
        %1288 = vmatpush1.xpose.msra.mxu0 0.0
        %1289 = vmatprep.subr.mxu0 0.0
        %1290 = vmatpush1.xpose.msra.mxu0 0.0
        %1291 = vmatprep.subr.mxu0 0.0
        %1292 = vmatpush1.xpose.msra.mxu0 0.0
        %1293 = vmatprep.subr.mxu0 0.0
        %1294 = vmatpush1.xpose.msra.mxu0 0.0
        %1295 = vmatprep.subr.mxu0 0.0
        %1296 = vmatpush1.xpose.msra.mxu0 0.0
        %1297 = vmatprep.subr.mxu0 0.0
        %1298 = vmatpush1.xpose.msra.mxu0 0.0
        %1299 = vmatprep.subr.mxu0 0.0
        %1300 = vmatpush1.xpose.msra.mxu0 0.0
        %1301 = vmatprep.subr.mxu0 0.0
        %1302 = vmatpush1.xpose.msra.mxu0 0.0
        %1303 = vmatprep.subr.mxu0 0.0
        %1304 = vmatpush1.xpose.msra.mxu0 0.0
        %1305 = vmatprep.subr.mxu0 0.0
        %1306 = vmatpush1.xpose.msra.mxu0 0.0
        %1307 = vmatprep.subr.mxu0 0.0
        %1308 = vmatpush1.xpose.msra.mxu0 0.0
        %1309 = vmatprep.subr.mxu0 0.0
        %1310 = vmatpush1.xpose.msra.mxu0 0.0
        %1311 = vmatprep.subr.mxu0 0.0
        %1312 = vmatpush1.xpose.msra.mxu0 0.0
        %1313 = vmatprep.subr.mxu0 0.0
        %1314 = vmatpush1.xpose.msra.mxu0 0.0
        %1315 = vmatprep.subr.mxu0 0.0
        %1316 = vmatpush1.xpose.msra.mxu0 0.0
        %1317 = vmatprep.subr.mxu0 0.0
        %1318 = vmatpush1.xpose.msra.mxu0 0.0
        %1319 = vmatprep.subr.mxu0 0.0
        %1320 = vmatpush1.xpose.msra.mxu0 0.0
        %1321 = vmatprep.subr.mxu0 0.0
        %1322 = vmatpush1.xpose.msra.mxu0 0.0
        %1323 = vmatprep.subr.mxu0 0.0
        %1324 = vmatpush1.xpose.msra.mxu0 0.0
        %1325 = vmatprep.subr.mxu0 0.0
        %1326 = vmatpush1.xpose.msra.mxu0 0.0
        %1327 = vmatprep.subr.mxu0 0.0
        %1328 = vmatpush1.xpose.msra.mxu0 0.0
        %1329 = vmatprep.subr.mxu0 0.0
        %1330 = vmatpush1.xpose.msra.mxu0 0.0
        %1331 = vmatprep.subr.mxu0 0.0
        %1332 = vmatpush1.xpose.msra.mxu0 0.0
        %1333 = vmatprep.subr.mxu0 0.0
        %1334 = vmatpush1.xpose.msra.mxu0 0.0
        %1335 = vmatprep.subr.mxu0 0.0
        %1336 = vmatpush1.xpose.msra.mxu0 0.0
        %1337 = vmatprep.subr.mxu0 0.0
        %1338 = vmatpush1.xpose.msra.mxu0 0.0
        %1339 = vmatprep.subr.mxu0 0.0
        %1340 = vmatpush1.xpose.msra.mxu0 0.0
        %1341 = vmatprep.subr.mxu0 0.0
        %1342 = vmatpush1.xpose.msra.mxu0 0.0
        %1343 = vmatprep.subr.mxu0 0.0
        %1344 = vmatpush1.xpose.msra.mxu0 0.0
        %1345 = vmatprep.subr.mxu0 0.0
        %1346 = vmatpush1.xpose.msra.mxu0 0.0
        %1347 = vmatprep.subr.mxu0 0.0
        %1348 = vmatpush1.xpose.msra.mxu0 0.0
        %1349 = vmatprep.mubr.f32.mxu0 0.0
        %1350 = vmatmul.mubr.f32.gmra.mrb[0].mxu0 %v1280
        %v1351 = vpop.f32.mrb[0].mxu0
        %v1352 = vadd.f32 %v702, %v1351
        %v1353 = vpop.f32.mrb[0].mxu0
        %1354 = vdwg.mxu0
        %s1355 = scalar_lea.vmem %s315, 24 [#allocation3]
        %1356 = vst.msk [vmem:[%s1355] sm:$0xff] %vm866, %v1352
        %s1357 = sand.u32 %s207, 1
        %s1358 = scalar_lea.sflag [#allocation4], %s1357
        %s1359 = sand.u32 %s207, 1
        %s1360 = smul.addr %s1359, 32
        %s1361 = scalar_lea.vmem [#allocation3], %s1360
        // Predicated region
        $region53: #{tpu_custom_call.1} parent=47 // pred_check
          %p1362 = pneg %p217
        $region54: #{tpu_custom_call.1} parent=47 // pred_check_branch
          %1364 = sbr.rel (%p1362) target = $region56
        $region55: #{tpu_custom_call.1} parent=47 // pred_region
          %s1366 = ssub.s32 512, 512
          %1367 = vsyncadd %s1358, %s1366
          %s1368 = smul.addr %s25, 4
          %s1369 = sadd.s32 %s26, %s1368
          %s1370 = smul.addr %s1369, 128
          %s1371 = scalar_lea.hbm %s7, %s1370
          %s1372 = sshll.u32 %s1361, 4
          %s1373 = int_to_ptr.vmem [resolvable:$true] %s1372
          %1378 = dma.vmem_to_hbm [thread:$0]  %s1373, 512, %s1371, %s1358, 128, 128, 8
        $region56: #{tpu_custom_call.1} parent=47 // pred_fallthru
          _
      $region48: #{tpu_custom_call.1} parent=5 // pred_fallthru
        _
      %p1379 = scmp.le.s32.totalorder 2, %s16
      // Predicated region
      $region57: #{tpu_custom_call.1} parent=5 // pred_check
        %p1380 = pneg %p1379
      $region58: #{tpu_custom_call.1} parent=5 // pred_check_branch
        %1382 = sbr.rel (%p1380) target = $region60
      $region59: #{tpu_custom_call.1} parent=5 // pred_region
        %s1383 = ssub.s32 %s16, 2
        // Predicated region
        $region61: #{tpu_custom_call.1} parent=59 // pred_check
          %p1384 = pneg %p223
        $region62: #{tpu_custom_call.1} parent=59 // pred_check_branch
          %1386 = sbr.rel (%p1384) target = $region64
        $region63: #{tpu_custom_call.1} parent=59 // pred_region
          %s1387 = sand.u32 %s208, 1
          %s1388 = scalar_lea.sflag [#allocation4], %s1387
          %s1389 = sand.u32 %s208, 1
          %s1390 = smul.addr %s1389, 32
          %s1391 = scalar_lea.vmem [#allocation3], %s1390
          %1392 = dma.done %s1388, 512
        $region64: #{tpu_custom_call.1} parent=59 // pred_fallthru
          _
      $region60: #{tpu_custom_call.1} parent=5 // pred_fallthru
        _
    $region6: #{tpu_custom_call.1} parent=1 // loop_footer
      %s20 = sadd.s32 1, %s16
    $region7: #{tpu_custom_call.1} parent=1 // loop_footer_branch
      %15 = sbr.rel target = $region3
    $region8: #{tpu_custom_call.1} parent=1 // loop_exit
      _
    %1393 = vsyncpa [#allocation4], 1
    %s1394 = scalar_lea.sflag [#allocation4], 1
    %1395 = vsyncpa %s1394, 1

</llo_original>
